<compile_context>
chip_gen: v6e
topology: v6e:2x2x1
jax: 0.10.0
libtpu: 0.0.40
codegen_flags: <defaults>
</compile_context>

<pallas_src>
import functools

import jax
import jax.numpy as jnp
from jax import lax
from jax.experimental import pallas as pl
from jax.experimental.pallas import tpu as pltpu

INPUT_DIM = 512
HIDDEN_DIM = 128


def gru_kernel(x_ref, wih_ref, whh_ref, bias_ref, out_ref, gx_ref, *, T, Bp, H):
    """Grid over K chunks of the input projection; recurrence on the last step.

    x_ref    : (T*Bp, tk)  bf16  column chunk of time-major, batch-padded input
    wih_ref  : (tk, 3H)    bf16  row chunk of W_ih^T, gate order [r | z | n]
    whh_ref  : (H, 3H)     bf16  W_hh^T (constant block index -> DMA'd once)
    bias_ref : (1, 4H)     f32   [b_ih + (b_hh_r, b_hh_z, 0) | b_hh_n]
    out_ref  : (Bp, H)     f32   h_T (written only at the last grid step)
    gx_ref   : (T*Bp, 3H)  f32   persistent scratch accumulating x @ W_ih^T + b
    """
    k = pl.program_id(0)
    nk = pl.num_programs(0)

    # Partial input projection for this K chunk (all T timesteps at once).
    part = jnp.dot(x_ref[...], wih_ref[...], preferred_element_type=jnp.float32)

    @pl.when(k == 0)
    def _():
        gx_ref[...] = part + bias_ref[:, 0:3 * H]

    @pl.when(k > 0)
    def _():
        gx_ref[...] += part

    # Serial recurrence once the projection is complete.
    @pl.when(k == nk - 1)
    def _():
        whh = whh_ref[...]                  # (H, 3H), resident for the loop
        b_hn = bias_ref[:, 3 * H:4 * H]     # (1, H)

        # t = 0: h0 == 0, so the recurrent matmul vanishes.
        gx0 = gx_ref[0:Bp, :]
        r = jax.nn.sigmoid(gx0[:, 0:H])
        z = jax.nn.sigmoid(gx0[:, H:2 * H])
        n = jnp.tanh(gx0[:, 2 * H:3 * H] + r * b_hn)
        h = n - z * n                       # == (1 - z) * n
        h_bf = h.astype(jnp.bfloat16)

        for t in range(1, T):               # small, static -> fully unrolled
            gx = gx_ref[t * Bp:(t + 1) * Bp, :]                      # (Bp, 3H)
            gh = jnp.dot(h_bf, whh, preferred_element_type=jnp.float32)
            # r/z (first 2H columns) first so EUP work can start while the
            # n tile is still draining from the MXU result path.
            r = jax.nn.sigmoid(gx[:, 0:H] + gh[:, 0:H])
            z = jax.nn.sigmoid(gx[:, H:2 * H] + gh[:, H:2 * H])
            n = jnp.tanh(gx[:, 2 * H:3 * H] + r * (gh[:, 2 * H:3 * H] + b_hn))
            h = n + z * (h - n)             # == (1 - z) * n + z * h
            h_bf = h.astype(jnp.bfloat16)

        out_ref[...] = h


def prepare_gru_params(w_ih, w_hh, b_ih, b_hh):
    """One-time weight prep (hoisted off the per-call path)."""
    H = w_hh.shape[1]
    wih_t = jnp.transpose(w_ih).astype(jnp.bfloat16)      # (D, 3H)
    whh_t = jnp.transpose(w_hh).astype(jnp.bfloat16)      # (H, 3H)
    # Fold b_hh's r/z parts into the hoisted bias; keep b_hh_n separate since
    # it sits inside r * (gh_n + b_hh_n). Pack everything into one (1, 4H).
    b_gx = b_ih + jnp.concatenate([b_hh[:2 * H], jnp.zeros((H,), b_hh.dtype)])
    bias = jnp.concatenate([b_gx, b_hh[2 * H:]]).reshape(1, 4 * H)
    return wih_t, whh_t, bias.astype(jnp.float32)


def gru_forward(x, wih_t, whh_t, bias, *, k_chunk=256):
    """x: (B, T, D) float32 (batch_first). Returns h_T of shape (B, H)."""
    B, T, D = x.shape
    H = whh_t.shape[0]

    # Pad batch to the 8-sublane multiple so tiles are never sublane-masked.
    Bp = max(8, ((B + 7) // 8) * 8)
    x_p = jnp.pad(x, ((0, Bp - B), (0, 0), (0, 0)))
    # Time-major, flattened to (T*Bp, D) so the hoisted projection has M=T*Bp.
    x_flat = jnp.transpose(x_p, (1, 0, 2)).reshape(T * Bp, D).astype(jnp.bfloat16)

    tk = k_chunk if D % k_chunk == 0 else D
    nk = D // tk

    kernel = functools.partial(gru_kernel, T=T, Bp=Bp, H=H)

    out = pl.pallas_call(
        kernel,
        out_shape=jax.ShapeDtypeStruct((Bp, H), jnp.float32),
        grid_spec=pltpu.PrefetchScalarGridSpec(
            num_scalar_prefetch=0,
            grid=(nk,),
            in_specs=[
                pl.BlockSpec((T * Bp, tk), lambda k: (0, k)),     # x column chunk
                pl.BlockSpec((tk, 3 * H), lambda k: (k, 0)),      # W_ih^T row chunk
                pl.BlockSpec((H, 3 * H), lambda k: (0, 0)),       # W_hh^T (resident)
                pl.BlockSpec((1, 4 * H), lambda k: (0, 0)),       # fused biases
            ],
            out_specs=pl.BlockSpec((Bp, H), lambda k: (0, 0)),
            scratch_shapes=[pltpu.VMEM((T * Bp, 3 * H), jnp.float32)],
        ),
        compiler_params=pltpu.CompilerParams(
            dimension_semantics=("arbitrary",)),
    )(x_flat, wih_t, whh_t, bias)

    return out[:B]


def gru_reference(x, w_ih, w_hh, b_ih, b_hh):
    """Pure-JAX f32 reference (matches torch.nn.GRU, batch_first, 1 layer)."""
    B, T, D = x.shape
    H = w_hh.shape[1]
    wih_t, whh_t = w_ih.T, w_hh.T

    def step(h, x_t):
        gx = x_t @ wih_t + b_ih
        gh = h @ whh_t + b_hh
        r = jax.nn.sigmoid(gx[:, 0:H] + gh[:, 0:H])
        z = jax.nn.sigmoid(gx[:, H:2 * H] + gh[:, H:2 * H])
        n = jnp.tanh(gx[:, 2 * H:3 * H] + r * gh[:, 2 * H:3 * H])
        h_new = (1.0 - z) * n + z * h
        return h_new, None

    h0 = jnp.zeros((B, H), jnp.float32)
    h_last, _ = lax.scan(step, h0, jnp.transpose(x, (1, 0, 2)))
    return h_last


if __name__ == "__main__":
    B, T, D, H = 2, 8, INPUT_DIM, HIDDEN_DIM

    key = jax.random.PRNGKey(0)
    kx, k1, k2, k3, k4 = jax.random.split(key, 5)

    # PyTorch-style uniform(-1/sqrt(H), 1/sqrt(H)) init.
    bound = 1.0 / jnp.sqrt(jnp.float32(H))
    w_ih = jax.random.uniform(k1, (3 * H, D), jnp.float32, -bound, bound)
    w_hh = jax.random.uniform(k2, (3 * H, H), jnp.float32, -bound, bound)
    b_ih = jax.random.uniform(k3, (3 * H,), jnp.float32, -bound, bound)
    b_hh = jax.random.uniform(k4, (3 * H,), jnp.float32, -bound, bound)

    x = jax.random.normal(kx, (B, T, D), jnp.float32)

    # One-time weight prep (kept out of the per-call path).
    wih_t, whh_t, bias = prepare_gru_params(w_ih, w_hh, b_ih, b_hh)

    out = gru_forward(x, wih_t, whh_t, bias)
    out = jax.block_until_ready(out)

    ref = gru_reference(x, w_ih, w_hh, b_ih, b_hh)
    assert out.shape == (B, H)
    # bf16 MXU operands (f32 accumulate) -> relaxed tolerance vs f32 reference.
    assert jnp.allclose(out, ref, atol=2e-2, rtol=2e-2), "mismatch vs reference"

    print("KERNEL_OK")
</pallas_src>

<mosaic_0001>
module attributes {stable_mosaic.version = 11 : i64} {
  func.func @gru_kernel(%arg0: i32, %arg1: memref<64x256xbf16, #tpu.memory_space<vmem>>, %arg2: memref<256x384xbf16, #tpu.memory_space<vmem>>, %arg3: memref<128x384xbf16, #tpu.memory_space<vmem>>, %arg4: memref<1x512xf32, #tpu.memory_space<vmem>>, %arg5: memref<8x128xf32, #tpu.memory_space<vmem>>, %arg6: memref<64x384xf32, #tpu.memory_space<vmem>>) attributes {dimension_semantics = [#tpu.dimension_semantics<arbitrary>], iteration_bounds = array<i64: 2>, scalar_prefetch = 0 : i64, scratch_operands = 1 : i64, tpu.core_type = #tpu.core_type<tc>, window_params = [{transform_indices = @transform_0, window_bounds = array<i64: 64, 256>}, {transform_indices = @transform_1, window_bounds = array<i64: 256, 384>}, {pipeline_mode = #tpu.pipeline_mode<synchronous>, transform_indices = @transform_2, window_bounds = array<i64: 128, 384>}, {pipeline_mode = #tpu.pipeline_mode<synchronous>, transform_indices = @transform_3, window_bounds = array<i64: 1, 512>}, {pipeline_mode = #tpu.pipeline_mode<synchronous>, transform_indices = @transform_4, window_bounds = array<i64: 8, 128>}]} {
    %c0 = arith.constant 0 : index
    %c0_0 = arith.constant 0 : index
    %0 = vector.load %arg1[%c0, %c0_0] : memref<64x256xbf16, #tpu.memory_space<vmem>>, vector<64x256xbf16>
    %c0_1 = arith.constant 0 : index
    %c0_2 = arith.constant 0 : index
    %1 = vector.load %arg2[%c0_1, %c0_2] : memref<256x384xbf16, #tpu.memory_space<vmem>>, vector<256x384xbf16>
    %cst = arith.constant dense<0.000000e+00> : vector<64x384xf32>
    %2 = tpu.matmul %0, %1, %cst {dimension_numbers = #tpu.dot_dimension_numbers<[1], [0], [0], [1], [0, 0, 1, 1], [], []>} : vector<64x256xbf16>, vector<256x384xbf16>, vector<64x384xf32> -> vector<64x384xf32>
    %c0_i32 = arith.constant 0 : i32
    %3 = arith.cmpi eq, %arg0, %c0_i32 : i32
    %4 = arith.extui %3 : i1 to i32
    %c0_i32_3 = arith.constant 0 : i32
    %5 = arith.cmpi ne, %4, %c0_i32_3 : i32
    scf.if %5 {
      %c0_7 = arith.constant 0 : index
      %c0_8 = arith.constant 0 : index
      %12 = vector.load %arg4[%c0_7, %c0_8] : memref<1x512xf32, #tpu.memory_space<vmem>>, vector<1x384xf32>
      %13 = vector.broadcast %12 : vector<1x384xf32> to vector<64x384xf32>
      %14 = arith.addf %2, %13 : vector<64x384xf32>
      %c0_9 = arith.constant 0 : index
      %c0_10 = arith.constant 0 : index
      %15 = vector.load %arg6[%c0_9, %c0_10] : memref<64x384xf32, #tpu.memory_space<vmem>>, vector<64x384xf32>
      tpu.vector_store %arg6[%c0_9, %c0_10], %14 {strides = array<i32>} : memref<64x384xf32, #tpu.memory_space<vmem>>, vector<64x384xf32>,
    } else {
    }
    %c0_i32_4 = arith.constant 0 : i32
    %6 = arith.cmpi sgt, %arg0, %c0_i32_4 : i32
    %7 = arith.extui %6 : i1 to i32
    %c0_i32_5 = arith.constant 0 : i32
    %8 = arith.cmpi ne, %7, %c0_i32_5 : i32
    scf.if %8 {
      %c0_7 = arith.constant 0 : index
      %c0_8 = arith.constant 0 : index
      %12 = vector.load %arg6[%c0_7, %c0_8] : memref<64x384xf32, #tpu.memory_space<vmem>>, vector<64x384xf32>
      %13 = arith.addf %12, %2 : vector<64x384xf32>
      %c0_9 = arith.constant 0 : index
      %c0_10 = arith.constant 0 : index
      %14 = vector.load %arg6[%c0_9, %c0_10] : memref<64x384xf32, #tpu.memory_space<vmem>>, vector<64x384xf32>
      tpu.vector_store %arg6[%c0_9, %c0_10], %13 {strides = array<i32>} : memref<64x384xf32, #tpu.memory_space<vmem>>, vector<64x384xf32>,
    } else {
    }
    %c1_i32 = arith.constant 1 : i32
    %9 = arith.cmpi eq, %arg0, %c1_i32 : i32
    %10 = arith.extui %9 : i1 to i32
    %c0_i32_6 = arith.constant 0 : i32
    %11 = arith.cmpi ne, %10, %c0_i32_6 : i32
    scf.if %11 {
      %c0_7 = arith.constant 0 : index
      %c0_8 = arith.constant 0 : index
      %12 = vector.load %arg3[%c0_7, %c0_8] : memref<128x384xbf16, #tpu.memory_space<vmem>>, vector<128x384xbf16>
      %c0_9 = arith.constant 0 : index
      %c384 = arith.constant 384 : index
      %13 = vector.load %arg4[%c0_9, %c384] : memref<1x512xf32, #tpu.memory_space<vmem>>, vector<1x128xf32>
      %c0_10 = arith.constant 0 : index
      %c0_11 = arith.constant 0 : index
      %14 = vector.load %arg6[%c0_10, %c0_11] : memref<64x384xf32, #tpu.memory_space<vmem>>, vector<8x384xf32>
      %15 = vector.extract_strided_slice %14 {offsets = [0, 0], sizes = [8, 128], strides = [1, 1]} : vector<8x384xf32> to vector<8x128xf32>
      %16 = arith.negf %15 : vector<8x128xf32>
      %17 = math.exp %16 : vector<8x128xf32>
      %cst_12 = arith.constant 1.000000e+00 : f32
      %18 = vector.broadcast %cst_12 : f32 to vector<8x128xf32>
      %19 = arith.addf %18, %17 : vector<8x128xf32>
      %20 = arith.divf %18, %19 : vector<8x128xf32>
      %21 = vector.extract_strided_slice %14 {offsets = [0, 128], sizes = [8, 128], strides = [1, 1]} : vector<8x384xf32> to vector<8x128xf32>
      %22 = arith.negf %21 : vector<8x128xf32>
      %23 = math.exp %22 : vector<8x128xf32>
      %cst_13 = arith.constant 1.000000e+00 : f32
      %24 = vector.broadcast %cst_13 : f32 to vector<8x128xf32>
      %25 = arith.addf %24, %23 : vector<8x128xf32>
      %26 = arith.divf %24, %25 : vector<8x128xf32>
      %27 = vector.extract_strided_slice %14 {offsets = [0, 256], sizes = [8, 128], strides = [1, 1]} : vector<8x384xf32> to vector<8x128xf32>
      %28 = vector.broadcast %13 : vector<1x128xf32> to vector<8x128xf32>
      %29 = arith.mulf %20, %28 : vector<8x128xf32>
      %30 = arith.addf %27, %29 : vector<8x128xf32>
      %31 = math.tanh %30 : vector<8x128xf32>
      %32 = arith.mulf %26, %31 : vector<8x128xf32>
      %33 = arith.subf %31, %32 : vector<8x128xf32>
      %34 = arith.truncf %33 : vector<8x128xf32> to vector<8x128xbf16>
      %c8 = arith.constant 8 : index
      %c0_14 = arith.constant 0 : index
      %35 = vector.load %arg6[%c8, %c0_14] : memref<64x384xf32, #tpu.memory_space<vmem>>, vector<8x384xf32>
      %cst_15 = arith.constant dense<0.000000e+00> : vector<8x384xf32>
      %36 = tpu.matmul %34, %12, %cst_15 {dimension_numbers = #tpu.dot_dimension_numbers<[1], [0], [0], [1], [0, 0, 1, 1], [], []>} : vector<8x128xbf16>, vector<128x384xbf16>, vector<8x384xf32> -> vector<8x384xf32>
      %37 = vector.extract_strided_slice %35 {offsets = [0, 0], sizes = [8, 128], strides = [1, 1]} : vector<8x384xf32> to vector<8x128xf32>
      %38 = vector.extract_strided_slice %36 {offsets = [0, 0], sizes = [8, 128], strides = [1, 1]} : vector<8x384xf32> to vector<8x128xf32>
      %39 = arith.addf %37, %38 : vector<8x128xf32>
      %40 = arith.negf %39 : vector<8x128xf32>
      %41 = math.exp %40 : vector<8x128xf32>
      %cst_16 = arith.constant 1.000000e+00 : f32
      %42 = vector.broadcast %cst_16 : f32 to vector<8x128xf32>
      %43 = arith.addf %42, %41 : vector<8x128xf32>
      %44 = arith.divf %42, %43 : vector<8x128xf32>
      %45 = vector.extract_strided_slice %35 {offsets = [0, 128], sizes = [8, 128], strides = [1, 1]} : vector<8x384xf32> to vector<8x128xf32>
      %46 = vector.extract_strided_slice %36 {offsets = [0, 128], sizes = [8, 128], strides = [1, 1]} : vector<8x384xf32> to vector<8x128xf32>
      %47 = arith.addf %45, %46 : vector<8x128xf32>
      %48 = arith.negf %47 : vector<8x128xf32>
      %49 = math.exp %48 : vector<8x128xf32>
      %cst_17 = arith.constant 1.000000e+00 : f32
      %50 = vector.broadcast %cst_17 : f32 to vector<8x128xf32>
      %51 = arith.addf %50, %49 : vector<8x128xf32>
      %52 = arith.divf %50, %51 : vector<8x128xf32>
      %53 = vector.extract_strided_slice %35 {offsets = [0, 256], sizes = [8, 128], strides = [1, 1]} : vector<8x384xf32> to vector<8x128xf32>
      %54 = vector.extract_strided_slice %36 {offsets = [0, 256], sizes = [8, 128], strides = [1, 1]} : vector<8x384xf32> to vector<8x128xf32>
      %55 = vector.broadcast %13 : vector<1x128xf32> to vector<8x128xf32>
      %56 = arith.addf %54, %55 : vector<8x128xf32>
      %57 = arith.mulf %44, %56 : vector<8x128xf32>
      %58 = arith.addf %53, %57 : vector<8x128xf32>
      %59 = math.tanh %58 : vector<8x128xf32>
      %60 = arith.subf %33, %59 : vector<8x128xf32>
      %61 = arith.mulf %52, %60 : vector<8x128xf32>
      %62 = arith.addf %59, %61 : vector<8x128xf32>
      %63 = arith.truncf %62 : vector<8x128xf32> to vector<8x128xbf16>
      %c16 = arith.constant 16 : index
      %c0_18 = arith.constant 0 : index
      %64 = vector.load %arg6[%c16, %c0_18] : memref<64x384xf32, #tpu.memory_space<vmem>>, vector<8x384xf32>
      %cst_19 = arith.constant dense<0.000000e+00> : vector<8x384xf32>
      %65 = tpu.matmul %63, %12, %cst_19 {dimension_numbers = #tpu.dot_dimension_numbers<[1], [0], [0], [1], [0, 0, 1, 1], [], []>} : vector<8x128xbf16>, vector<128x384xbf16>, vector<8x384xf32> -> vector<8x384xf32>
      %66 = vector.extract_strided_slice %64 {offsets = [0, 0], sizes = [8, 128], strides = [1, 1]} : vector<8x384xf32> to vector<8x128xf32>
      %67 = vector.extract_strided_slice %65 {offsets = [0, 0], sizes = [8, 128], strides = [1, 1]} : vector<8x384xf32> to vector<8x128xf32>
      %68 = arith.addf %66, %67 : vector<8x128xf32>
      %69 = arith.negf %68 : vector<8x128xf32>
      %70 = math.exp %69 : vector<8x128xf32>
      %cst_20 = arith.constant 1.000000e+00 : f32
      %71 = vector.broadcast %cst_20 : f32 to vector<8x128xf32>
      %72 = arith.addf %71, %70 : vector<8x128xf32>
      %73 = arith.divf %71, %72 : vector<8x128xf32>
      %74 = vector.extract_strided_slice %64 {offsets = [0, 128], sizes = [8, 128], strides = [1, 1]} : vector<8x384xf32> to vector<8x128xf32>
      %75 = vector.extract_strided_slice %65 {offsets = [0, 128], sizes = [8, 128], strides = [1, 1]} : vector<8x384xf32> to vector<8x128xf32>
      %76 = arith.addf %74, %75 : vector<8x128xf32>
      %77 = arith.negf %76 : vector<8x128xf32>
      %78 = math.exp %77 : vector<8x128xf32>
      %cst_21 = arith.constant 1.000000e+00 : f32
      %79 = vector.broadcast %cst_21 : f32 to vector<8x128xf32>
      %80 = arith.addf %79, %78 : vector<8x128xf32>
      %81 = arith.divf %79, %80 : vector<8x128xf32>
      %82 = vector.extract_strided_slice %64 {offsets = [0, 256], sizes = [8, 128], strides = [1, 1]} : vector<8x384xf32> to vector<8x128xf32>
      %83 = vector.extract_strided_slice %65 {offsets = [0, 256], sizes = [8, 128], strides = [1, 1]} : vector<8x384xf32> to vector<8x128xf32>
      %84 = vector.broadcast %13 : vector<1x128xf32> to vector<8x128xf32>
      %85 = arith.addf %83, %84 : vector<8x128xf32>
      %86 = arith.mulf %73, %85 : vector<8x128xf32>
      %87 = arith.addf %82, %86 : vector<8x128xf32>
      %88 = math.tanh %87 : vector<8x128xf32>
      %89 = arith.subf %62, %88 : vector<8x128xf32>
      %90 = arith.mulf %81, %89 : vector<8x128xf32>
      %91 = arith.addf %88, %90 : vector<8x128xf32>
      %92 = arith.truncf %91 : vector<8x128xf32> to vector<8x128xbf16>
      %c24 = arith.constant 24 : index
      %c0_22 = arith.constant 0 : index
      %93 = vector.load %arg6[%c24, %c0_22] : memref<64x384xf32, #tpu.memory_space<vmem>>, vector<8x384xf32>
      %cst_23 = arith.constant dense<0.000000e+00> : vector<8x384xf32>
      %94 = tpu.matmul %92, %12, %cst_23 {dimension_numbers = #tpu.dot_dimension_numbers<[1], [0], [0], [1], [0, 0, 1, 1], [], []>} : vector<8x128xbf16>, vector<128x384xbf16>, vector<8x384xf32> -> vector<8x384xf32>
      %95 = vector.extract_strided_slice %93 {offsets = [0, 0], sizes = [8, 128], strides = [1, 1]} : vector<8x384xf32> to vector<8x128xf32>
      %96 = vector.extract_strided_slice %94 {offsets = [0, 0], sizes = [8, 128], strides = [1, 1]} : vector<8x384xf32> to vector<8x128xf32>
      %97 = arith.addf %95, %96 : vector<8x128xf32>
      %98 = arith.negf %97 : vector<8x128xf32>
      %99 = math.exp %98 : vector<8x128xf32>
      %cst_24 = arith.constant 1.000000e+00 : f32
      %100 = vector.broadcast %cst_24 : f32 to vector<8x128xf32>
      %101 = arith.addf %100, %99 : vector<8x128xf32>
      %102 = arith.divf %100, %101 : vector<8x128xf32>
      %103 = vector.extract_strided_slice %93 {offsets = [0, 128], sizes = [8, 128], strides = [1, 1]} : vector<8x384xf32> to vector<8x128xf32>
      %104 = vector.extract_strided_slice %94 {offsets = [0, 128], sizes = [8, 128], strides = [1, 1]} : vector<8x384xf32> to vector<8x128xf32>
      %105 = arith.addf %103, %104 : vector<8x128xf32>
      %106 = arith.negf %105 : vector<8x128xf32>
      %107 = math.exp %106 : vector<8x128xf32>
      %cst_25 = arith.constant 1.000000e+00 : f32
      %108 = vector.broadcast %cst_25 : f32 to vector<8x128xf32>
      %109 = arith.addf %108, %107 : vector<8x128xf32>
      %110 = arith.divf %108, %109 : vector<8x128xf32>
      %111 = vector.extract_strided_slice %93 {offsets = [0, 256], sizes = [8, 128], strides = [1, 1]} : vector<8x384xf32> to vector<8x128xf32>
      %112 = vector.extract_strided_slice %94 {offsets = [0, 256], sizes = [8, 128], strides = [1, 1]} : vector<8x384xf32> to vector<8x128xf32>
      %113 = vector.broadcast %13 : vector<1x128xf32> to vector<8x128xf32>
      %114 = arith.addf %112, %113 : vector<8x128xf32>
      %115 = arith.mulf %102, %114 : vector<8x128xf32>
      %116 = arith.addf %111, %115 : vector<8x128xf32>
      %117 = math.tanh %116 : vector<8x128xf32>
      %118 = arith.subf %91, %117 : vector<8x128xf32>
      %119 = arith.mulf %110, %118 : vector<8x128xf32>
      %120 = arith.addf %117, %119 : vector<8x128xf32>
      %121 = arith.truncf %120 : vector<8x128xf32> to vector<8x128xbf16>
      %c32 = arith.constant 32 : index
      %c0_26 = arith.constant 0 : index
      %122 = vector.load %arg6[%c32, %c0_26] : memref<64x384xf32, #tpu.memory_space<vmem>>, vector<8x384xf32>
      %cst_27 = arith.constant dense<0.000000e+00> : vector<8x384xf32>
      %123 = tpu.matmul %121, %12, %cst_27 {dimension_numbers = #tpu.dot_dimension_numbers<[1], [0], [0], [1], [0, 0, 1, 1], [], []>} : vector<8x128xbf16>, vector<128x384xbf16>, vector<8x384xf32> -> vector<8x384xf32>
      %124 = vector.extract_strided_slice %122 {offsets = [0, 0], sizes = [8, 128], strides = [1, 1]} : vector<8x384xf32> to vector<8x128xf32>
      %125 = vector.extract_strided_slice %123 {offsets = [0, 0], sizes = [8, 128], strides = [1, 1]} : vector<8x384xf32> to vector<8x128xf32>
      %126 = arith.addf %124, %125 : vector<8x128xf32>
      %127 = arith.negf %126 : vector<8x128xf32>
      %128 = math.exp %127 : vector<8x128xf32>
      %cst_28 = arith.constant 1.000000e+00 : f32
      %129 = vector.broadcast %cst_28 : f32 to vector<8x128xf32>
      %130 = arith.addf %129, %128 : vector<8x128xf32>
      %131 = arith.divf %129, %130 : vector<8x128xf32>
      %132 = vector.extract_strided_slice %122 {offsets = [0, 128], sizes = [8, 128], strides = [1, 1]} : vector<8x384xf32> to vector<8x128xf32>
      %133 = vector.extract_strided_slice %123 {offsets = [0, 128], sizes = [8, 128], strides = [1, 1]} : vector<8x384xf32> to vector<8x128xf32>
      %134 = arith.addf %132, %133 : vector<8x128xf32>
      %135 = arith.negf %134 : vector<8x128xf32>
      %136 = math.exp %135 : vector<8x128xf32>
      %cst_29 = arith.constant 1.000000e+00 : f32
      %137 = vector.broadcast %cst_29 : f32 to vector<8x128xf32>
      %138 = arith.addf %137, %136 : vector<8x128xf32>
      %139 = arith.divf %137, %138 : vector<8x128xf32>
      %140 = vector.extract_strided_slice %122 {offsets = [0, 256], sizes = [8, 128], strides = [1, 1]} : vector<8x384xf32> to vector<8x128xf32>
      %141 = vector.extract_strided_slice %123 {offsets = [0, 256], sizes = [8, 128], strides = [1, 1]} : vector<8x384xf32> to vector<8x128xf32>
      %142 = vector.broadcast %13 : vector<1x128xf32> to vector<8x128xf32>
      %143 = arith.addf %141, %142 : vector<8x128xf32>
      %144 = arith.mulf %131, %143 : vector<8x128xf32>
      %145 = arith.addf %140, %144 : vector<8x128xf32>
      %146 = math.tanh %145 : vector<8x128xf32>
      %147 = arith.subf %120, %146 : vector<8x128xf32>
      %148 = arith.mulf %139, %147 : vector<8x128xf32>
      %149 = arith.addf %146, %148 : vector<8x128xf32>
      %150 = arith.truncf %149 : vector<8x128xf32> to vector<8x128xbf16>
      %c40 = arith.constant 40 : index
      %c0_30 = arith.constant 0 : index
      %151 = vector.load %arg6[%c40, %c0_30] : memref<64x384xf32, #tpu.memory_space<vmem>>, vector<8x384xf32>
      %cst_31 = arith.constant dense<0.000000e+00> : vector<8x384xf32>
      %152 = tpu.matmul %150, %12, %cst_31 {dimension_numbers = #tpu.dot_dimension_numbers<[1], [0], [0], [1], [0, 0, 1, 1], [], []>} : vector<8x128xbf16>, vector<128x384xbf16>, vector<8x384xf32> -> vector<8x384xf32>
      %153 = vector.extract_strided_slice %151 {offsets = [0, 0], sizes = [8, 128], strides = [1, 1]} : vector<8x384xf32> to vector<8x128xf32>
      %154 = vector.extract_strided_slice %152 {offsets = [0, 0], sizes = [8, 128], strides = [1, 1]} : vector<8x384xf32> to vector<8x128xf32>
      %155 = arith.addf %153, %154 : vector<8x128xf32>
      %156 = arith.negf %155 : vector<8x128xf32>
      %157 = math.exp %156 : vector<8x128xf32>
      %cst_32 = arith.constant 1.000000e+00 : f32
      %158 = vector.broadcast %cst_32 : f32 to vector<8x128xf32>
      %159 = arith.addf %158, %157 : vector<8x128xf32>
      %160 = arith.divf %158, %159 : vector<8x128xf32>
      %161 = vector.extract_strided_slice %151 {offsets = [0, 128], sizes = [8, 128], strides = [1, 1]} : vector<8x384xf32> to vector<8x128xf32>
      %162 = vector.extract_strided_slice %152 {offsets = [0, 128], sizes = [8, 128], strides = [1, 1]} : vector<8x384xf32> to vector<8x128xf32>
      %163 = arith.addf %161, %162 : vector<8x128xf32>
      %164 = arith.negf %163 : vector<8x128xf32>
      %165 = math.exp %164 : vector<8x128xf32>
      %cst_33 = arith.constant 1.000000e+00 : f32
      %166 = vector.broadcast %cst_33 : f32 to vector<8x128xf32>
      %167 = arith.addf %166, %165 : vector<8x128xf32>
      %168 = arith.divf %166, %167 : vector<8x128xf32>
      %169 = vector.extract_strided_slice %151 {offsets = [0, 256], sizes = [8, 128], strides = [1, 1]} : vector<8x384xf32> to vector<8x128xf32>
      %170 = vector.extract_strided_slice %152 {offsets = [0, 256], sizes = [8, 128], strides = [1, 1]} : vector<8x384xf32> to vector<8x128xf32>
      %171 = vector.broadcast %13 : vector<1x128xf32> to vector<8x128xf32>
      %172 = arith.addf %170, %171 : vector<8x128xf32>
      %173 = arith.mulf %160, %172 : vector<8x128xf32>
      %174 = arith.addf %169, %173 : vector<8x128xf32>
      %175 = math.tanh %174 : vector<8x128xf32>
      %176 = arith.subf %149, %175 : vector<8x128xf32>
      %177 = arith.mulf %168, %176 : vector<8x128xf32>
      %178 = arith.addf %175, %177 : vector<8x128xf32>
      %179 = arith.truncf %178 : vector<8x128xf32> to vector<8x128xbf16>
      %c48 = arith.constant 48 : index
      %c0_34 = arith.constant 0 : index
      %180 = vector.load %arg6[%c48, %c0_34] : memref<64x384xf32, #tpu.memory_space<vmem>>, vector<8x384xf32>
      %cst_35 = arith.constant dense<0.000000e+00> : vector<8x384xf32>
      %181 = tpu.matmul %179, %12, %cst_35 {dimension_numbers = #tpu.dot_dimension_numbers<[1], [0], [0], [1], [0, 0, 1, 1], [], []>} : vector<8x128xbf16>, vector<128x384xbf16>, vector<8x384xf32> -> vector<8x384xf32>
      %182 = vector.extract_strided_slice %180 {offsets = [0, 0], sizes = [8, 128], strides = [1, 1]} : vector<8x384xf32> to vector<8x128xf32>
      %183 = vector.extract_strided_slice %181 {offsets = [0, 0], sizes = [8, 128], strides = [1, 1]} : vector<8x384xf32> to vector<8x128xf32>
      %184 = arith.addf %182, %183 : vector<8x128xf32>
      %185 = arith.negf %184 : vector<8x128xf32>
      %186 = math.exp %185 : vector<8x128xf32>
      %cst_36 = arith.constant 1.000000e+00 : f32
      %187 = vector.broadcast %cst_36 : f32 to vector<8x128xf32>
      %188 = arith.addf %187, %186 : vector<8x128xf32>
      %189 = arith.divf %187, %188 : vector<8x128xf32>
      %190 = vector.extract_strided_slice %180 {offsets = [0, 128], sizes = [8, 128], strides = [1, 1]} : vector<8x384xf32> to vector<8x128xf32>
      %191 = vector.extract_strided_slice %181 {offsets = [0, 128], sizes = [8, 128], strides = [1, 1]} : vector<8x384xf32> to vector<8x128xf32>
      %192 = arith.addf %190, %191 : vector<8x128xf32>
      %193 = arith.negf %192 : vector<8x128xf32>
      %194 = math.exp %193 : vector<8x128xf32>
      %cst_37 = arith.constant 1.000000e+00 : f32
      %195 = vector.broadcast %cst_37 : f32 to vector<8x128xf32>
      %196 = arith.addf %195, %194 : vector<8x128xf32>
      %197 = arith.divf %195, %196 : vector<8x128xf32>
      %198 = vector.extract_strided_slice %180 {offsets = [0, 256], sizes = [8, 128], strides = [1, 1]} : vector<8x384xf32> to vector<8x128xf32>
      %199 = vector.extract_strided_slice %181 {offsets = [0, 256], sizes = [8, 128], strides = [1, 1]} : vector<8x384xf32> to vector<8x128xf32>
      %200 = vector.broadcast %13 : vector<1x128xf32> to vector<8x128xf32>
      %201 = arith.addf %199, %200 : vector<8x128xf32>
      %202 = arith.mulf %189, %201 : vector<8x128xf32>
      %203 = arith.addf %198, %202 : vector<8x128xf32>
      %204 = math.tanh %203 : vector<8x128xf32>
      %205 = arith.subf %178, %204 : vector<8x128xf32>
      %206 = arith.mulf %197, %205 : vector<8x128xf32>
      %207 = arith.addf %204, %206 : vector<8x128xf32>
      %208 = arith.truncf %207 : vector<8x128xf32> to vector<8x128xbf16>
      %c56 = arith.constant 56 : index
      %c0_38 = arith.constant 0 : index
      %209 = vector.load %arg6[%c56, %c0_38] : memref<64x384xf32, #tpu.memory_space<vmem>>, vector<8x384xf32>
      %cst_39 = arith.constant dense<0.000000e+00> : vector<8x384xf32>
      %210 = tpu.matmul %208, %12, %cst_39 {dimension_numbers = #tpu.dot_dimension_numbers<[1], [0], [0], [1], [0, 0, 1, 1], [], []>} : vector<8x128xbf16>, vector<128x384xbf16>, vector<8x384xf32> -> vector<8x384xf32>
      %211 = vector.extract_strided_slice %209 {offsets = [0, 0], sizes = [8, 128], strides = [1, 1]} : vector<8x384xf32> to vector<8x128xf32>
      %212 = vector.extract_strided_slice %210 {offsets = [0, 0], sizes = [8, 128], strides = [1, 1]} : vector<8x384xf32> to vector<8x128xf32>
      %213 = arith.addf %211, %212 : vector<8x128xf32>
      %214 = arith.negf %213 : vector<8x128xf32>
      %215 = math.exp %214 : vector<8x128xf32>
      %cst_40 = arith.constant 1.000000e+00 : f32
      %216 = vector.broadcast %cst_40 : f32 to vector<8x128xf32>
      %217 = arith.addf %216, %215 : vector<8x128xf32>
      %218 = arith.divf %216, %217 : vector<8x128xf32>
      %219 = vector.extract_strided_slice %209 {offsets = [0, 128], sizes = [8, 128], strides = [1, 1]} : vector<8x384xf32> to vector<8x128xf32>
      %220 = vector.extract_strided_slice %210 {offsets = [0, 128], sizes = [8, 128], strides = [1, 1]} : vector<8x384xf32> to vector<8x128xf32>
      %221 = arith.addf %219, %220 : vector<8x128xf32>
      %222 = arith.negf %221 : vector<8x128xf32>
      %223 = math.exp %222 : vector<8x128xf32>
      %cst_41 = arith.constant 1.000000e+00 : f32
      %224 = vector.broadcast %cst_41 : f32 to vector<8x128xf32>
      %225 = arith.addf %224, %223 : vector<8x128xf32>
      %226 = arith.divf %224, %225 : vector<8x128xf32>
      %227 = vector.extract_strided_slice %209 {offsets = [0, 256], sizes = [8, 128], strides = [1, 1]} : vector<8x384xf32> to vector<8x128xf32>
      %228 = vector.extract_strided_slice %210 {offsets = [0, 256], sizes = [8, 128], strides = [1, 1]} : vector<8x384xf32> to vector<8x128xf32>
      %229 = vector.broadcast %13 : vector<1x128xf32> to vector<8x128xf32>
      %230 = arith.addf %228, %229 : vector<8x128xf32>
      %231 = arith.mulf %218, %230 : vector<8x128xf32>
      %232 = arith.addf %227, %231 : vector<8x128xf32>
      %233 = math.tanh %232 : vector<8x128xf32>
      %234 = arith.subf %207, %233 : vector<8x128xf32>
      %235 = arith.mulf %226, %234 : vector<8x128xf32>
      %236 = arith.addf %233, %235 : vector<8x128xf32>
      %c0_42 = arith.constant 0 : index
      %c0_43 = arith.constant 0 : index
      %237 = vector.load %arg5[%c0_42, %c0_43] : memref<8x128xf32, #tpu.memory_space<vmem>>, vector<8x128xf32>
      tpu.vector_store %arg5[%c0_42, %c0_43], %236 {strides = array<i32>} : memref<8x128xf32, #tpu.memory_space<vmem>>, vector<8x128xf32>,
    } else {
    }
    return
  }
  func.func @transform_0(%arg0: i32) -> (i32, i32) {
    %c0_i32 = arith.constant 0 : i32
    %c0_i32_0 = arith.constant 0 : i32
    return %c0_i32, %arg0 : i32, i32
  }
  func.func @transform_1(%arg0: i32) -> (i32, i32) {
    %c0_i32 = arith.constant 0 : i32
    %c0_i32_0 = arith.constant 0 : i32
    return %arg0, %c0_i32 : i32, i32
  }
  func.func @transform_2(%arg0: i32) -> (i32, i32) {
    %c0_i32 = arith.constant 0 : i32
    %c0_i32_0 = arith.constant 0 : i32
    %c0_i32_1 = arith.constant 0 : i32
    return %c0_i32, %c0_i32_0 : i32, i32
  }
  func.func @transform_3(%arg0: i32) -> (i32, i32) {
    %c0_i32 = arith.constant 0 : i32
    %c0_i32_0 = arith.constant 0 : i32
    %c0_i32_1 = arith.constant 0 : i32
    return %c0_i32, %c0_i32_0 : i32, i32
  }
  func.func @transform_4(%arg0: i32) -> (i32, i32) {
    %c0_i32 = arith.constant 0 : i32
    %c0_i32_0 = arith.constant 0 : i32
    %c0_i32_1 = arith.constant 0 : i32
    return %c0_i32, %c0_i32_0 : i32, i32
  }
}

</mosaic_0001>

<llo_original>
// kernel: tpu_custom_call.1
$region0: #{tpu_custom_call.1}
  #allocation0 [shape = 'u32[]', space=smem, size = 0x4, offset = 0x4, fixed_abs, tag = 'smem constant byte address 0x4 - core index']
  #allocation1 [shape = 'u32[144,128]{1,0:T(1,128)}', space=vmem, size = 0x12000, scoped, tag = 'internal scratch']
  #allocation2 [shape = 'f32[64,384]{1,0:T(8,128)}', space=vmem, size = 0x18000, scoped, tag = 'scratch operand']
  %s0 = inlined_call_operand.hbm [shape: bf16[64,512], index: 0, kind: input, shape index: {}]
  %s1 = inlined_call_operand.hbm [shape: bf16[512,384], index: 1, kind: input, shape index: {}]
  %s2 = inlined_call_operand.hbm [shape: bf16[128,384], index: 2, kind: input, shape index: {}]
  %s3 = inlined_call_operand.vmem [shape: f32[1,512], index: 3, kind: input, shape index: {}]
  %s4 = inlined_call_operand.hbm [shape: f32[8,128], index: 4, kind: output, shape index: {}]
  %s5 = sld [smem:[#allocation0]]
  $region73: #{tpu_custom_call.1} parent=0
    _
  %s7 = ssub.s32 1, %s5
  %s8 = scalar_select 0, %s7, %s5
  $region1: #{tpu_custom_call.1} parent=0
    #allocation3 [shape = 'u8[65536]{0}', space=vmem, size = 0x10000, scoped, tag = 'input window, operand 0']
    #allocation4 [shape = 's32[2]{0}', space=sflag, size = 0x8, scoped, tag = 'scoped memory for tpu_custom_call.1']
    #allocation5 [shape = 's32[2]{0}', space=sflag, size = 0x8, scoped, tag = 'scoped memory for tpu_custom_call.1']
    #allocation6 [shape = 'u8[393216]{0}', space=vmem, size = 0x60000, scoped, tag = 'input window, operand 1']
    #allocation7 [shape = 's32[2]{0}', space=sflag, size = 0x8, scoped, tag = 'scoped memory for tpu_custom_call.1']
    #allocation8 [shape = 'u8[98304]{0}', space=vmem, size = 0x18000, scoped, tag = 'input window, operand 2, single buffered']
    #allocation9 [shape = 'u8[4096]{0}', space=vmem, size = 0x1000, scoped, tag = 'output window, operand 0, single buffered']
    %9 = vsyncpa [#allocation4], 0
    %s10 = scalar_lea.sflag [#allocation4], 1
    %11 = vsyncpa %s10, 0
    %12 = vsyncpa [#allocation7], 0
    %s13 = scalar_lea.sflag [#allocation7], 1
    %14 = vsyncpa %s13, 0
    %15 = vsyncpa [#allocation5], 0
    loop: start=0, step=1, limit=4
    $region2: #{tpu_custom_call.1} parent=1 // loop_pre_header
      _
    $region3: #{tpu_custom_call.1} parent=1 // loop_header
      %s17 = sphi 0, %s21
      %p18 = scmp.ge.s32.totalorder %s17, 4
      %s27 = sphi 0, %s29
      %s30 = sphi 0, %s27
      %s31 = sphi 0, %s30
      %s47 = sphi 0, %s31
      %s53 = sphi 0, %s55
      %s56 = sphi 0, %s53
      %s57 = sphi 0, %s56
      %s73 = sphi 0, %s57
      %s77 = sphi 0, %s77
      %s79 = sphi 0, %s77
      %s80 = sphi 0, %s79
      %s94 = sphi 0, %s80
      %s98 = sphi 0, %s98
      %s100 = sphi 0, %s98
      %s101 = sphi 0, %s100
      %s115 = sphi 0, %s101
      %s119 = sphi 0, %s119
      %s121 = sphi 0, %s119
      %s122 = sphi 0, %s121
      %s136 = sphi 0, %s122
    $region4: #{tpu_custom_call.1} parent=1 // loop_header_branch
      %20 = sbr.rel (%p18) target = $region8
    $region5: #{tpu_custom_call.1} parent=1 // loop_body
      %s22 = ssub.s32 %s17, 1
      %s23 = ssub.s32 %s17, 2
      %s24 = sadd.s32 %s17, 1
      %s25 = ssub.s32 %s17, %s24
      %p26 = scmp.eq.s32.totalorder %s25, 0
      %s28 = sadd.s32 %s27, 1
      %s29 = scalar_select %p26, %s27, %s28
      %p32 = pneg %p26
      %p33 = scmp.eq.s32.totalorder %s17, 1
      %p34 = por %p32, %p33
      %p35 = scmp.ne.s32.totalorder %s27, %s30
      %p36 = scmp.eq.s32.totalorder %s17, 0
      %p37 = por %p35, %p36
      %p38 = scmp.ne.s32.totalorder %s27, %s30
      %p39 = scmp.eq.s32.totalorder %s22, 1
      %p40 = por %p38, %p39
      %p41 = scmp.ne.s32.totalorder %s30, %s31
      %p42 = scmp.eq.s32.totalorder %s22, 0
      %p43 = por %p41, %p42
      %p44 = scmp.ne.s32.totalorder %s30, %s31
      %p45 = scmp.eq.s32.totalorder %s23, 1
      %p46 = por %p44, %p45
      %p48 = scmp.ne.s32.totalorder %s31, %s47
      %p49 = scmp.eq.s32.totalorder %s23, 0
      %p50 = por %p48, %p49
      %s51 = ssub.s32 %s17, %s24
      %p52 = scmp.eq.s32.totalorder %s51, 0
      %s54 = sadd.s32 %s53, 1
      %s55 = scalar_select %p52, %s53, %s54
      %p58 = pneg %p52
      %p59 = scmp.eq.s32.totalorder %s17, 1
      %p60 = por %p58, %p59
      %p61 = scmp.ne.s32.totalorder %s53, %s56
      %p62 = scmp.eq.s32.totalorder %s17, 0
      %p63 = por %p61, %p62
      %p64 = scmp.ne.s32.totalorder %s53, %s56
      %p65 = scmp.eq.s32.totalorder %s22, 1
      %p66 = por %p64, %p65
      %p67 = scmp.ne.s32.totalorder %s56, %s57
      %p68 = scmp.eq.s32.totalorder %s22, 0
      %p69 = por %p67, %p68
      %p70 = scmp.ne.s32.totalorder %s56, %s57
      %p71 = scmp.eq.s32.totalorder %s23, 1
      %p72 = por %p70, %p71
      %p74 = scmp.ne.s32.totalorder %s57, %s73
      %p75 = scmp.eq.s32.totalorder %s23, 0
      %p76 = por %p74, %p75
      %s78 = sadd.s32 %s77, 1
      %p81 = scmp.eq.s32.totalorder %s17, 1
      %p82 = scmp.ne.s32.totalorder %s77, %s79
      %p83 = scmp.eq.s32.totalorder %s17, 0
      %p84 = por %p82, %p83
      %p85 = scmp.ne.s32.totalorder %s77, %s79
      %p86 = scmp.eq.s32.totalorder %s22, 1
      %p87 = por %p85, %p86
      %p88 = scmp.ne.s32.totalorder %s79, %s80
      %p89 = scmp.eq.s32.totalorder %s22, 0
      %p90 = por %p88, %p89
      %p91 = scmp.ne.s32.totalorder %s79, %s80
      %p92 = scmp.eq.s32.totalorder %s23, 1
      %p93 = por %p91, %p92
      %p95 = scmp.ne.s32.totalorder %s80, %s94
      %p96 = scmp.eq.s32.totalorder %s23, 0
      %p97 = por %p95, %p96
      %s99 = sadd.s32 %s98, 1
      %p102 = scmp.eq.s32.totalorder %s17, 1
      %p103 = scmp.ne.s32.totalorder %s98, %s100
      %p104 = scmp.eq.s32.totalorder %s17, 0
      %p105 = por %p103, %p104
      %p106 = scmp.ne.s32.totalorder %s98, %s100
      %p107 = scmp.eq.s32.totalorder %s22, 1
      %p108 = por %p106, %p107
      %p109 = scmp.ne.s32.totalorder %s100, %s101
      %p110 = scmp.eq.s32.totalorder %s22, 0
      %p111 = por %p109, %p110
      %p112 = scmp.ne.s32.totalorder %s100, %s101
      %p113 = scmp.eq.s32.totalorder %s23, 1
      %p114 = por %p112, %p113
      %p116 = scmp.ne.s32.totalorder %s101, %s115
      %p117 = scmp.eq.s32.totalorder %s23, 0
      %p118 = por %p116, %p117
      %s120 = sadd.s32 %s119, 1
      %p123 = scmp.eq.s32.totalorder %s17, 1
      %p124 = scmp.ne.s32.totalorder %s119, %s121
      %p125 = scmp.eq.s32.totalorder %s17, 0
      %p126 = por %p124, %p125
      %p127 = scmp.ne.s32.totalorder %s119, %s121
      %p128 = scmp.eq.s32.totalorder %s22, 1
      %p129 = por %p127, %p128
      %p130 = scmp.ne.s32.totalorder %s121, %s122
      %p131 = scmp.eq.s32.totalorder %s22, 0
      %p132 = por %p130, %p131
      %p133 = scmp.ne.s32.totalorder %s121, %s122
      %p134 = scmp.eq.s32.totalorder %s23, 1
      %p135 = por %p133, %p134
      %p137 = scmp.ne.s32.totalorder %s122, %s136
      %p138 = scmp.eq.s32.totalorder %s23, 0
      %p139 = por %p137, %p138
      %p140 = scmp.le.s32.totalorder 1, %s17
      %p141 = scmp.lt.s32.totalorder %s17, 3
      %p142 = pnand %p140, %p141
      %p143 = pneg %p142
      // Predicated region
      $region9: #{tpu_custom_call.1} parent=5 // pred_check
        _
      $region10: #{tpu_custom_call.1} parent=5 // pred_check_branch
        %145 = sbr.rel (%p142) target = $region12
      $region11: #{tpu_custom_call.1} parent=5 // pred_region
        %s146 = ssub.s32 %s17, 1
        // Predicated region
        $region13: #{tpu_custom_call.1} parent=11 // pred_check
          %p147 = pneg %p90
        $region14: #{tpu_custom_call.1} parent=11 // pred_check_branch
          %149 = sbr.rel (%p147) target = $region16
        $region15: #{tpu_custom_call.1} parent=11 // pred_region
          %s151 = ssub.s32 3072, 3072
          %152 = vsyncadd [#allocation7], %s151
          %s153 = sshll.u32 [#allocation8], 4
          %s154 = int_to_ptr.vmem [resolvable:$true] %s153
          %159 = dma.hbm_to_vmem [thread:$0]  %s2, 3072, %s154, [#allocation7], 192, 192, 12
        $region16: #{tpu_custom_call.1} parent=11 // pred_fallthru
          _
        // Predicated region
        $region17: #{tpu_custom_call.1} parent=11 // pred_check
          %p160 = pneg %p111
        $region18: #{tpu_custom_call.1} parent=11 // pred_check_branch
          %162 = sbr.rel (%p160) target = $region20
        $region19: #{tpu_custom_call.1} parent=11 // pred_region
          _
        $region20: #{tpu_custom_call.1} parent=11 // pred_fallthru
          _
      $region12: #{tpu_custom_call.1} parent=5 // pred_fallthru
        _
      %p163 = scmp.lt.s32.totalorder %s17, 2
      // Predicated region
      $region21: #{tpu_custom_call.1} parent=5 // pred_check
        %p164 = pneg %p163
      $region22: #{tpu_custom_call.1} parent=5 // pred_check_branch
        %166 = sbr.rel (%p164) target = $region24
      $region23: #{tpu_custom_call.1} parent=5 // pred_region
        // Predicated region
        $region25: #{tpu_custom_call.1} parent=23 // pred_check
          %p167 = pneg %p37
        $region26: #{tpu_custom_call.1} parent=23 // pred_check_branch
          %169 = sbr.rel (%p167) target = $region28
        $region27: #{tpu_custom_call.1} parent=23 // pred_region
          %s170 = sand.u32 %s27, 1
          %s171 = scalar_lea.sflag [#allocation4], %s170
          %s172 = sand.u32 %s27, 1
          %s173 = smul.addr %s172, 64
          %s174 = scalar_lea.vmem [#allocation3], %s173
          %s175 = smul.u32 2, %s17
          %s177 = ssub.s32 1024, 1024
          %178 = vsyncadd %s171, %s177
          %s179 = smul.addr %s175, 64
          %s180 = scalar_lea.hbm %s0, %s179
          %s181 = sshll.u32 %s174, 4
          %s182 = int_to_ptr.vmem [resolvable:$true] %s181
          %187 = dma.hbm_to_vmem [thread:$0]  %s180, 1024, %s182, %s171, 256, 128, 8
        $region28: #{tpu_custom_call.1} parent=23 // pred_fallthru
          _
        // Predicated region
        $region29: #{tpu_custom_call.1} parent=23 // pred_check
          %p188 = pneg %p63
        $region30: #{tpu_custom_call.1} parent=23 // pred_check_branch
          %190 = sbr.rel (%p188) target = $region32
        $region31: #{tpu_custom_call.1} parent=23 // pred_region
          %s191 = sand.u32 %s17, 1
          %s192 = scalar_lea.sflag [#allocation7], %s191
          %s193 = sand.u32 %s53, 1
          %s194 = smul.addr %s193, 384
          %s195 = scalar_lea.vmem [#allocation6], %s194
          %s196 = smul.u32 32, %s17
          %s198 = ssub.s32 6144, 6144
          %199 = vsyncadd %s192, %s198
          %s200 = smul.addr %s196, 3
          %s201 = smul.addr %s200, 64
          %s202 = scalar_lea.hbm %s1, %s201
          %s203 = sshll.u32 %s195, 4
          %s204 = int_to_ptr.vmem [resolvable:$true] %s203
          %209 = dma.hbm_to_vmem [thread:$0]  %s202, 6144, %s204, %s192, 192, 192, 12
        $region32: #{tpu_custom_call.1} parent=23 // pred_fallthru
          _
      $region24: #{tpu_custom_call.1} parent=5 // pred_fallthru
        _
      %p210 = scmp.le.s32.totalorder 1, %s17
      %p211 = scmp.lt.s32.totalorder %s17, 3
      %p212 = pnand %p210, %p211
      %p213 = pneg %p212
      // Predicated region
      $region33: #{tpu_custom_call.1} parent=5 // pred_check
        _
      $region34: #{tpu_custom_call.1} parent=5 // pred_check_branch
        %215 = sbr.rel (%p212) target = $region36
      $region35: #{tpu_custom_call.1} parent=5 // pred_region
        %s216 = ssub.s32 %s17, 1
        %s217 = sand.u32 %s30, 1
        %s218 = scalar_lea.sflag [#allocation4], %s217
        %s219 = sand.u32 %s30, 1
        %s220 = smul.addr %s219, 64
        %s221 = scalar_lea.vmem [#allocation3], %s220
        // Predicated region
        $region37: #{tpu_custom_call.1} parent=35 // pred_check
          %p222 = pneg %p43
        $region38: #{tpu_custom_call.1} parent=35 // pred_check_branch
          %224 = sbr.rel (%p222) target = $region40
        $region39: #{tpu_custom_call.1} parent=35 // pred_region
          %225 = dma.done %s218, 1024
        $region40: #{tpu_custom_call.1} parent=35 // pred_fallthru
          _
        %s226 = sand.u32 %s22, 1
        %s227 = scalar_lea.sflag [#allocation7], %s226
        %s228 = sand.u32 %s56, 1
        %s229 = smul.addr %s228, 384
        %s230 = scalar_lea.vmem [#allocation6], %s229
        // Predicated region
        $region41: #{tpu_custom_call.1} parent=35 // pred_check
          %p231 = pneg %p69
        $region42: #{tpu_custom_call.1} parent=35 // pred_check_branch
          %233 = sbr.rel (%p231) target = $region44
        $region43: #{tpu_custom_call.1} parent=35 // pred_region
          %234 = dma.done %s227, 6144
        $region44: #{tpu_custom_call.1} parent=35 // pred_fallthru
          _
        // Predicated region
        $region45: #{tpu_custom_call.1} parent=35 // pred_check
          %p235 = pneg %p90
        $region46: #{tpu_custom_call.1} parent=35 // pred_check_branch
          %237 = sbr.rel (%p235) target = $region48
        $region47: #{tpu_custom_call.1} parent=35 // pred_region
          %238 = dma.done [#allocation7], 3072
        $region48: #{tpu_custom_call.1} parent=35 // pred_fallthru
          _
        %s239 = sand.u32 %s30, 1
        %s240 = scalar_lea.sflag [#allocation4], %s239
        %s241 = sand.u32 %s30, 1
        %s242 = smul.addr %s241, 64
        %s243 = scalar_lea.vmem [#allocation3], %s242
        %p244 = pneg %p43
        %p245 = pneg %p40
        %s246 = sand.u32 %s22, 1
        %s247 = scalar_lea.sflag [#allocation7], %s246
        %s248 = sand.u32 %s56, 1
        %s249 = smul.addr %s248, 384
        %s250 = scalar_lea.vmem [#allocation6], %s249
        %p251 = pneg %p69
        %p252 = pneg %p66
        %p253 = pneg %p90
        %p254 = pneg %p87
        %p255 = pneg %p111
        %p256 = pneg %p108
        %p257 = pneg %p132
        %p258 = pneg %p129
        %s259 = smul.u32 2, %s22
        %s260 = smul.u32 32, %s22
        %v262 = vld [vmem:[%s221] sm:$0xff]
        %v263 = vld [vmem:[%s221 + $0x8] sm:$0xff]
        %v264 = vld [vmem:[%s221 + $0x10] sm:$0xff]
        %v265 = vld [vmem:[%s221 + $0x18] sm:$0xff]
        %v266 = vld [vmem:[%s221 + $0x20] sm:$0xff]
        %v267 = vld [vmem:[%s221 + $0x28] sm:$0xff]
        %v268 = vld [vmem:[%s221 + $0x30] sm:$0xff]
        %v269 = vld [vmem:[%s221 + $0x38] sm:$0xff]
        %v270 = vld [vmem:[%s230] sm:$0xff]
        %v271 = vld [vmem:[%s230 + $0x8] sm:$0xf]
        %v272 = vld [vmem:[%s230 + $0xc] sm:$0xff]
        %v273 = vld [vmem:[%s230 + $0x14] sm:$0xf]
        %v274 = vld [vmem:[%s230 + $0x18] sm:$0xff]
        %v275 = vld [vmem:[%s230 + $0x20] sm:$0xf]
        %v276 = vld [vmem:[%s230 + $0x24] sm:$0xff]
        %v277 = vld [vmem:[%s230 + $0x2c] sm:$0xf]
        %v278 = vld [vmem:[%s230 + $0x30] sm:$0xff]
        %v279 = vld [vmem:[%s230 + $0x38] sm:$0xf]
        %v280 = vld [vmem:[%s230 + $0x3c] sm:$0xff]
        %v281 = vld [vmem:[%s230 + $0x44] sm:$0xf]
        %v282 = vld [vmem:[%s230 + $0x48] sm:$0xff]
        %v283 = vld [vmem:[%s230 + $0x50] sm:$0xf]
        %v284 = vld [vmem:[%s230 + $0x54] sm:$0xff]
        %v285 = vld [vmem:[%s230 + $0x5c] sm:$0xf]
        %v286 = vld [vmem:[%s230 + $0x60] sm:$0xff]
        %v287 = vld [vmem:[%s230 + $0x68] sm:$0xf]
        %v288 = vld [vmem:[%s230 + $0x6c] sm:$0xff]
        %v289 = vld [vmem:[%s230 + $0x74] sm:$0xf]
        %v290 = vld [vmem:[%s230 + $0x78] sm:$0xff]
        %v291 = vld [vmem:[%s230 + $0x80] sm:$0xf]
        %v292 = vld [vmem:[%s230 + $0x84] sm:$0xff]
        %v293 = vld [vmem:[%s230 + $0x8c] sm:$0xf]
        %v294 = vld [vmem:[%s230 + $0x90] sm:$0xff]
        %v295 = vld [vmem:[%s230 + $0x98] sm:$0xf]
        %v296 = vld [vmem:[%s230 + $0x9c] sm:$0xff]
        %v297 = vld [vmem:[%s230 + $0xa4] sm:$0xf]
        %v298 = vld [vmem:[%s230 + $0xa8] sm:$0xff]
        %v299 = vld [vmem:[%s230 + $0xb0] sm:$0xf]
        %v300 = vld [vmem:[%s230 + $0xb4] sm:$0xff]
        %v301 = vld [vmem:[%s230 + $0xbc] sm:$0xf]
        %v302 = vld [vmem:[%s230 + $0xc0] sm:$0xff]
        %v303 = vld [vmem:[%s230 + $0xc8] sm:$0xf]
        %v304 = vld [vmem:[%s230 + $0xcc] sm:$0xff]
        %v305 = vld [vmem:[%s230 + $0xd4] sm:$0xf]
        %v306 = vld [vmem:[%s230 + $0xd8] sm:$0xff]
        %v307 = vld [vmem:[%s230 + $0xe0] sm:$0xf]
        %v308 = vld [vmem:[%s230 + $0xe4] sm:$0xff]
        %v309 = vld [vmem:[%s230 + $0xec] sm:$0xf]
        %v310 = vld [vmem:[%s230 + $0xf0] sm:$0xff]
        %v311 = vld [vmem:[%s230 + $0xf8] sm:$0xf]
        %v312 = vld [vmem:[%s230 + $0xfc] sm:$0xff]
        %v313 = vld [vmem:[%s230 + $0x104] sm:$0xf]
        %v314 = vld [vmem:[%s230 + $0x108] sm:$0xff]
        %v315 = vld [vmem:[%s230 + $0x110] sm:$0xf]
        %v316 = vld [vmem:[%s230 + $0x114] sm:$0xff]
        %v317 = vld [vmem:[%s230 + $0x11c] sm:$0xf]
        %v318 = vld [vmem:[%s230 + $0x120] sm:$0xff]
        %v319 = vld [vmem:[%s230 + $0x128] sm:$0xf]
        %v320 = vld [vmem:[%s230 + $0x12c] sm:$0xff]
        %v321 = vld [vmem:[%s230 + $0x134] sm:$0xf]
        %v322 = vld [vmem:[%s230 + $0x138] sm:$0xff]
        %v323 = vld [vmem:[%s230 + $0x140] sm:$0xf]
        %v324 = vld [vmem:[%s230 + $0x144] sm:$0xff]
        %v325 = vld [vmem:[%s230 + $0x14c] sm:$0xf]
        %v326 = vld [vmem:[%s230 + $0x150] sm:$0xff]
        %v327 = vld [vmem:[%s230 + $0x158] sm:$0xf]
        %v328 = vld [vmem:[%s230 + $0x15c] sm:$0xff]
        %v329 = vld [vmem:[%s230 + $0x164] sm:$0xf]
        %v330 = vld [vmem:[%s230 + $0x168] sm:$0xff]
        %v331 = vld [vmem:[%s230 + $0x170] sm:$0xf]
        %v332 = vld [vmem:[%s230 + $0x174] sm:$0xff]
        %v333 = vld [vmem:[%s230 + $0x17c] sm:$0xf]
        %v342 = vunpack.c.l.b16 %v262
        %v343 = vunpack.c.h.b16 %v262
        %v344 = vunpack.c.l.b16 %v263
        %v345 = vunpack.c.h.b16 %v263
        %v346 = vunpack.c.l.b16 %v264
        %v347 = vunpack.c.h.b16 %v264
        %v348 = vunpack.c.l.b16 %v265
        %v349 = vunpack.c.h.b16 %v265
        %v350 = vunpack.c.l.b16 %v266
        %v351 = vunpack.c.h.b16 %v266
        %v352 = vunpack.c.l.b16 %v267
        %v353 = vunpack.c.h.b16 %v267
        %v354 = vunpack.c.l.b16 %v268
        %v355 = vunpack.c.h.b16 %v268
        %v356 = vunpack.c.l.b16 %v269
        %v357 = vunpack.c.h.b16 %v269
        %v358 = vpack.c.b16 %v344, %v342
        %v359 = vpack.c.b16 %v345, %v343
        %v360 = vpack.c.b16 %v348, %v346
        %v361 = vpack.c.b16 %v349, %v347
        %v362 = vpack.c.b16 %v352, %v350
        %v363 = vpack.c.b16 %v353, %v351
        %v364 = vpack.c.b16 %v356, %v354
        %v365 = vpack.c.b16 %v357, %v355
        %v438 = vunpack.c.l.b16 %v270
        %v439 = vunpack.c.h.b16 %v270
        %v440 = vunpack.c.l.b16 %v271
        %v441 = vunpack.c.l.b16 %v272
        %v442 = vunpack.c.h.b16 %v272
        %v443 = vunpack.c.l.b16 %v273
        %v444 = vunpack.c.l.b16 %v274
        %v445 = vunpack.c.h.b16 %v274
        %v446 = vunpack.c.l.b16 %v275
        %v447 = vunpack.c.l.b16 %v276
        %v448 = vunpack.c.h.b16 %v276
        %v449 = vunpack.c.l.b16 %v277
        %v450 = vunpack.c.l.b16 %v278
        %v451 = vunpack.c.h.b16 %v278
        %v452 = vunpack.c.l.b16 %v279
        %v453 = vunpack.c.l.b16 %v280
        %v454 = vunpack.c.h.b16 %v280
        %v455 = vunpack.c.l.b16 %v281
        %v456 = vunpack.c.l.b16 %v282
        %v457 = vunpack.c.h.b16 %v282
        %v458 = vunpack.c.l.b16 %v283
        %v459 = vunpack.c.l.b16 %v284
        %v460 = vunpack.c.h.b16 %v284
        %v461 = vunpack.c.l.b16 %v285
        %v462 = vunpack.c.l.b16 %v286
        %v463 = vunpack.c.h.b16 %v286
        %v464 = vunpack.c.l.b16 %v287
        %v465 = vunpack.c.l.b16 %v288
        %v466 = vunpack.c.h.b16 %v288
        %v467 = vunpack.c.l.b16 %v289
        %v468 = vunpack.c.l.b16 %v290
        %v469 = vunpack.c.h.b16 %v290
        %v470 = vunpack.c.l.b16 %v291
        %v471 = vunpack.c.l.b16 %v292
        %v472 = vunpack.c.h.b16 %v292
        %v473 = vunpack.c.l.b16 %v293
        %v474 = vunpack.c.l.b16 %v294
        %v475 = vunpack.c.h.b16 %v294
        %v476 = vunpack.c.l.b16 %v295
        %v477 = vunpack.c.l.b16 %v296
        %v478 = vunpack.c.h.b16 %v296
        %v479 = vunpack.c.l.b16 %v297
        %v480 = vunpack.c.l.b16 %v298
        %v481 = vunpack.c.h.b16 %v298
        %v482 = vunpack.c.l.b16 %v299
        %v483 = vunpack.c.l.b16 %v300
        %v484 = vunpack.c.h.b16 %v300
        %v485 = vunpack.c.l.b16 %v301
        %v486 = vunpack.c.l.b16 %v302
        %v487 = vunpack.c.h.b16 %v302
        %v488 = vunpack.c.l.b16 %v303
        %v489 = vunpack.c.l.b16 %v304
        %v490 = vunpack.c.h.b16 %v304
        %v491 = vunpack.c.l.b16 %v305
        %v492 = vunpack.c.l.b16 %v306
        %v493 = vunpack.c.h.b16 %v306
        %v494 = vunpack.c.l.b16 %v307
        %v495 = vunpack.c.l.b16 %v308
        %v496 = vunpack.c.h.b16 %v308
        %v497 = vunpack.c.l.b16 %v309
        %v498 = vunpack.c.l.b16 %v310
        %v499 = vunpack.c.h.b16 %v310
        %v500 = vunpack.c.l.b16 %v311
        %v501 = vunpack.c.l.b16 %v312
        %v502 = vunpack.c.h.b16 %v312
        %v503 = vunpack.c.l.b16 %v313
        %v504 = vunpack.c.l.b16 %v314
        %v505 = vunpack.c.h.b16 %v314
        %v506 = vunpack.c.l.b16 %v315
        %v507 = vunpack.c.l.b16 %v316
        %v508 = vunpack.c.h.b16 %v316
        %v509 = vunpack.c.l.b16 %v317
        %v510 = vunpack.c.l.b16 %v318
        %v511 = vunpack.c.h.b16 %v318
        %v512 = vunpack.c.l.b16 %v319
        %v513 = vunpack.c.l.b16 %v320
        %v514 = vunpack.c.h.b16 %v320
        %v515 = vunpack.c.l.b16 %v321
        %v516 = vunpack.c.l.b16 %v322
        %v517 = vunpack.c.h.b16 %v322
        %v518 = vunpack.c.l.b16 %v323
        %v519 = vunpack.c.l.b16 %v324
        %v520 = vunpack.c.h.b16 %v324
        %v521 = vunpack.c.l.b16 %v325
        %v522 = vunpack.c.l.b16 %v326
        %v523 = vunpack.c.h.b16 %v326
        %v524 = vunpack.c.l.b16 %v327
        %v525 = vunpack.c.l.b16 %v328
        %v526 = vunpack.c.h.b16 %v328
        %v527 = vunpack.c.l.b16 %v329
        %v528 = vunpack.c.l.b16 %v330
        %v529 = vunpack.c.h.b16 %v330
        %v530 = vunpack.c.l.b16 %v331
        %v531 = vunpack.c.l.b16 %v332
        %v532 = vunpack.c.h.b16 %v332
        %v533 = vunpack.c.l.b16 %v333
        %v534 = vpack.c.b16 %v441, %v438
        %v535 = vpack.c.b16 %v442, %v439
        %v536 = vpack.c.b16 %v443, %v440
        %v537 = vpack.c.b16 %v447, %v444
        %v538 = vpack.c.b16 %v448, %v445
        %v539 = vpack.c.b16 %v449, %v446
        %v540 = vpack.c.b16 %v453, %v450
        %v541 = vpack.c.b16 %v454, %v451
        %v542 = vpack.c.b16 %v455, %v452
        %v543 = vpack.c.b16 %v459, %v456
        %v544 = vpack.c.b16 %v460, %v457
        %v545 = vpack.c.b16 %v461, %v458
        %v546 = vpack.c.b16 %v465, %v462
        %v547 = vpack.c.b16 %v466, %v463
        %v548 = vpack.c.b16 %v467, %v464
        %v549 = vpack.c.b16 %v471, %v468
        %v550 = vpack.c.b16 %v472, %v469
        %v551 = vpack.c.b16 %v473, %v470
        %v552 = vpack.c.b16 %v477, %v474
        %v553 = vpack.c.b16 %v478, %v475
        %v554 = vpack.c.b16 %v479, %v476
        %v555 = vpack.c.b16 %v483, %v480
        %v556 = vpack.c.b16 %v484, %v481
        %v557 = vpack.c.b16 %v485, %v482
        %v558 = vpack.c.b16 %v489, %v486
        %v559 = vpack.c.b16 %v490, %v487
        %v560 = vpack.c.b16 %v491, %v488
        %v561 = vpack.c.b16 %v495, %v492
        %v562 = vpack.c.b16 %v496, %v493
        %v563 = vpack.c.b16 %v497, %v494
        %v564 = vpack.c.b16 %v501, %v498
        %v565 = vpack.c.b16 %v502, %v499
        %v566 = vpack.c.b16 %v503, %v500
        %v567 = vpack.c.b16 %v507, %v504
        %v568 = vpack.c.b16 %v508, %v505
        %v569 = vpack.c.b16 %v509, %v506
        %v570 = vpack.c.b16 %v513, %v510
        %v571 = vpack.c.b16 %v514, %v511
        %v572 = vpack.c.b16 %v515, %v512
        %v573 = vpack.c.b16 %v519, %v516
        %v574 = vpack.c.b16 %v520, %v517
        %v575 = vpack.c.b16 %v521, %v518
        %v576 = vpack.c.b16 %v525, %v522
        %v577 = vpack.c.b16 %v526, %v523
        %v578 = vpack.c.b16 %v527, %v524
        %v579 = vpack.c.b16 %v531, %v528
        %v580 = vpack.c.b16 %v532, %v529
        %v581 = vpack.c.b16 %v533, %v530
        %630 = vmatprep.subr.bf16.mxu0 %v556
        %631 = vmatpush1.bf16.msra.mxu0 %v555
        %632 = vmatprep.subr.bf16.mxu0 %v553
        %633 = vmatpush1.bf16.msra.mxu0 %v552
        %634 = vmatprep.subr.bf16.mxu0 %v550
        %635 = vmatpush1.bf16.msra.mxu0 %v549
        %636 = vmatprep.subr.bf16.mxu0 %v547
        %637 = vmatpush1.bf16.msra.mxu0 %v546
        %638 = vmatprep.subr.bf16.mxu0 %v544
        %639 = vmatpush1.bf16.msra.mxu0 %v543
        %640 = vmatprep.subr.bf16.mxu0 %v541
        %641 = vmatpush1.bf16.msra.mxu0 %v540
        %642 = vmatprep.subr.bf16.mxu0 %v538
        %643 = vmatpush1.bf16.msra.mxu0 %v537
        %644 = vmatprep.subr.bf16.mxu0 %v535
        %645 = vmatpush1.bf16.msra.mxu0 %v534
        %646 = vmatprep.subr.bf16.mxu0 %v580
        %647 = vmatpush2.bf16.msra.mxu0 %v579
        %648 = vmatprep.subr.bf16.mxu0 %v577
        %649 = vmatpush2.bf16.msra.mxu0 %v576
        %650 = vmatprep.subr.bf16.mxu0 %v574
        %651 = vmatpush2.bf16.msra.mxu0 %v573
        %652 = vmatprep.subr.bf16.mxu0 %v571
        %653 = vmatpush2.bf16.msra.mxu0 %v570
        %654 = vmatprep.subr.bf16.mxu0 %v568
        %655 = vmatpush2.bf16.msra.mxu0 %v567
        %656 = vmatprep.subr.bf16.mxu0 %v565
        %657 = vmatpush2.bf16.msra.mxu0 %v564
        %658 = vmatprep.subr.bf16.mxu0 %v562
        %659 = vmatpush2.bf16.msra.mxu0 %v561
        %660 = vmatprep.subr.bf16.mxu0 %v559
        %661 = vmatpush2.bf16.msra.mxu0 %v558
        %662 = vmatprep.mubr.bf16.mxu0 %v359
        %663 = vmatmul.mubr.bf16.gmra.mxu0 %v358
        %v664 = vpop.f32.mrf.mxu0
        %v665 = vadd.f32 0.0, %v664
        %v666 = vpop.f32.mrf.mxu0
        %v667 = vadd.f32 0.0, %v666
        %v668 = vpop.f32.mrf.mxu0
        %v669 = vadd.f32 0.0, %v668
        %v670 = vpop.f32.mrf.mxu0
        %v671 = vadd.f32 0.0, %v670
        %672 = vmatprep.mubr.bf16.mxu0 %v361
        %673 = vmatmul.mubr.bf16.gmra.mxu0 %v360
        %v674 = vpop.f32.mrf.mxu0
        %v675 = vadd.f32 0.0, %v674
        %v676 = vpop.f32.mrf.mxu0
        %v677 = vadd.f32 0.0, %v676
        %v678 = vpop.f32.mrf.mxu0
        %v679 = vadd.f32 0.0, %v678
        %v680 = vpop.f32.mrf.mxu0
        %v681 = vadd.f32 0.0, %v680
        %682 = vmatprep.mubr.bf16.mxu0 %v363
        %683 = vmatmul.mubr.bf16.gmra.mxu0 %v362
        %v684 = vpop.f32.mrf.mxu0
        %v685 = vadd.f32 0.0, %v684
        %v686 = vpop.f32.mrf.mxu0
        %v687 = vadd.f32 0.0, %v686
        %v688 = vpop.f32.mrf.mxu0
        %v689 = vadd.f32 0.0, %v688
        %v690 = vpop.f32.mrf.mxu0
        %v691 = vadd.f32 0.0, %v690
        %692 = vmatprep.mubr.bf16.mxu0 %v365
        %693 = vmatmul.mubr.bf16.gmra.mxu0 %v364
        %v694 = vpop.f32.mrf.mxu0
        %v695 = vadd.f32 0.0, %v694
        %v696 = vpop.f32.mrf.mxu0
        %v697 = vadd.f32 0.0, %v696
        %v698 = vpop.f32.mrf.mxu0
        %v699 = vadd.f32 0.0, %v698
        %v700 = vpop.f32.mrf.mxu0
        %v701 = vadd.f32 0.0, %v700
        %702 = vdwg.mxu0
        %703 = vmatprep.subr.bf16.mxu0 0
        %704 = vmatpush1.bf16.msra.mxu0 %v557
        %705 = vmatprep.subr.bf16.mxu0 0
        %706 = vmatpush1.bf16.msra.mxu0 %v554
        %707 = vmatprep.subr.bf16.mxu0 0
        %708 = vmatpush1.bf16.msra.mxu0 %v551
        %709 = vmatprep.subr.bf16.mxu0 0
        %710 = vmatpush1.bf16.msra.mxu0 %v548
        %711 = vmatprep.subr.bf16.mxu0 0
        %712 = vmatpush1.bf16.msra.mxu0 %v545
        %713 = vmatprep.subr.bf16.mxu0 0
        %714 = vmatpush1.bf16.msra.mxu0 %v542
        %715 = vmatprep.subr.bf16.mxu0 0
        %716 = vmatpush1.bf16.msra.mxu0 %v539
        %717 = vmatprep.subr.bf16.mxu0 0
        %718 = vmatpush1.bf16.msra.mxu0 %v536
        %719 = vmatprep.subr.bf16.mxu0 0
        %720 = vmatpush2.bf16.msra.mxu0 %v581
        %721 = vmatprep.subr.bf16.mxu0 0
        %722 = vmatpush2.bf16.msra.mxu0 %v578
        %723 = vmatprep.subr.bf16.mxu0 0
        %724 = vmatpush2.bf16.msra.mxu0 %v575
        %725 = vmatprep.subr.bf16.mxu0 0
        %726 = vmatpush2.bf16.msra.mxu0 %v572
        %727 = vmatprep.subr.bf16.mxu0 0
        %728 = vmatpush2.bf16.msra.mxu0 %v569
        %729 = vmatprep.subr.bf16.mxu0 0
        %730 = vmatpush2.bf16.msra.mxu0 %v566
        %731 = vmatprep.subr.bf16.mxu0 0
        %732 = vmatpush2.bf16.msra.mxu0 %v563
        %733 = vmatprep.subr.bf16.mxu0 0
        %734 = vmatpush2.bf16.msra.mxu0 %v560
        %735 = vmatprep.mubr.bf16.mxu0 %v359
        %736 = vmatmul.mubr.bf16.gmra.mxu0 %v358
        %v737 = vpop.f32.mrf.mxu0
        %v738 = vadd.f32 0.0, %v737
        %v739 = vpop.f32.mrf.mxu0
        %v740 = vpop.f32.mrf.mxu0
        %v741 = vadd.f32 0.0, %v740
        %v742 = vpop.f32.mrf.mxu0
        %743 = vmatprep.mubr.bf16.mxu0 %v361
        %744 = vmatmul.mubr.bf16.gmra.mxu0 %v360
        %v745 = vpop.f32.mrf.mxu0
        %v746 = vadd.f32 0.0, %v745
        %v747 = vpop.f32.mrf.mxu0
        %v748 = vpop.f32.mrf.mxu0
        %v749 = vadd.f32 0.0, %v748
        %v750 = vpop.f32.mrf.mxu0
        %751 = vmatprep.mubr.bf16.mxu0 %v363
        %752 = vmatmul.mubr.bf16.gmra.mxu0 %v362
        %v753 = vpop.f32.mrf.mxu0
        %v754 = vadd.f32 0.0, %v753
        %v755 = vpop.f32.mrf.mxu0
        %v756 = vpop.f32.mrf.mxu0
        %v757 = vadd.f32 0.0, %v756
        %v758 = vpop.f32.mrf.mxu0
        %759 = vmatprep.mubr.bf16.mxu0 %v365
        %760 = vmatmul.mubr.bf16.gmra.mxu0 %v364
        %v761 = vpop.f32.mrf.mxu0
        %v762 = vadd.f32 0.0, %v761
        %v763 = vpop.f32.mrf.mxu0
        %v764 = vpop.f32.mrf.mxu0
        %v765 = vadd.f32 0.0, %v764
        %v766 = vpop.f32.mrf.mxu0
        %767 = vdwg.mxu0
        %p768 = scmp.eq.s32.totalorder %s22, 0
        // Predicated region
        $region49: #{tpu_custom_call.1} parent=35 // pred_check
          %p769 = pneg %p768
        $region50: #{tpu_custom_call.1} parent=35 // pred_check_branch
          %771 = sbr.rel (%p769) target = $region52
        $region51: #{tpu_custom_call.1} parent=35 // pred_region
          %v772 = vld [vmem:[%s3] sm:$0x7]
          %v774 = vlaneseq
          %v775 = vshrl.u32 %v774, 7
          %v776 = vsub.s32 0, %v775
          %v777 = vrot.slane %v772, %v776
          %v778 = vlaneseq
          %v779 = vshrl.u32 %v778, 7
          %v780 = vsub.s32 1, %v779
          %v781 = vrot.slane %v772, %v780
          %v782 = vlaneseq
          %v783 = vshrl.u32 %v782, 7
          %v784 = vsub.s32 2, %v783
          %v785 = vrot.slane %v772, %v784
          %v789 = vadd.f32 %v665, %v777
          %v790 = vadd.f32 %v667, %v781
          %v791 = vadd.f32 %v738, %v785
          %v792 = vadd.f32 %v669, %v777
          %v793 = vadd.f32 %v671, %v781
          %v794 = vadd.f32 %v741, %v785
          %v795 = vadd.f32 %v675, %v777
          %v796 = vadd.f32 %v677, %v781
          %v797 = vadd.f32 %v746, %v785
          %v798 = vadd.f32 %v679, %v777
          %v799 = vadd.f32 %v681, %v781
          %v800 = vadd.f32 %v749, %v785
          %v801 = vadd.f32 %v685, %v777
          %v802 = vadd.f32 %v687, %v781
          %v803 = vadd.f32 %v754, %v785
          %v804 = vadd.f32 %v689, %v777
          %v805 = vadd.f32 %v691, %v781
          %v806 = vadd.f32 %v757, %v785
          %v807 = vadd.f32 %v695, %v777
          %v808 = vadd.f32 %v697, %v781
          %v809 = vadd.f32 %v762, %v785
          %v810 = vadd.f32 %v699, %v777
          %v811 = vadd.f32 %v701, %v781
          %v812 = vadd.f32 %v765, %v785
          %813 = vst [vmem:[#allocation2] sm:$0xff] %v789
          %814 = vst [vmem:[#allocation2 + $0x8] sm:$0xff] %v790
          %815 = vst [vmem:[#allocation2 + $0x10] sm:$0xff] %v791
          %816 = vst [vmem:[#allocation2 + $0x18] sm:$0xff] %v792
          %817 = vst [vmem:[#allocation2 + $0x20] sm:$0xff] %v793
          %818 = vst [vmem:[#allocation2 + $0x28] sm:$0xff] %v794
          %819 = vst [vmem:[#allocation2 + $0x30] sm:$0xff] %v795
          %820 = vst [vmem:[#allocation2 + $0x38] sm:$0xff] %v796
          %821 = vst [vmem:[#allocation2 + $0x40] sm:$0xff] %v797
          %822 = vst [vmem:[#allocation2 + $0x48] sm:$0xff] %v798
          %823 = vst [vmem:[#allocation2 + $0x50] sm:$0xff] %v799
          %824 = vst [vmem:[#allocation2 + $0x58] sm:$0xff] %v800
          %825 = vst [vmem:[#allocation2 + $0x60] sm:$0xff] %v801
          %826 = vst [vmem:[#allocation2 + $0x68] sm:$0xff] %v802
          %827 = vst [vmem:[#allocation2 + $0x70] sm:$0xff] %v803
          %828 = vst [vmem:[#allocation2 + $0x78] sm:$0xff] %v804
          %829 = vst [vmem:[#allocation2 + $0x80] sm:$0xff] %v805
          %830 = vst [vmem:[#allocation2 + $0x88] sm:$0xff] %v806
          %831 = vst [vmem:[#allocation2 + $0x90] sm:$0xff] %v807
          %832 = vst [vmem:[#allocation2 + $0x98] sm:$0xff] %v808
          %833 = vst [vmem:[#allocation2 + $0xa0] sm:$0xff] %v809
          %834 = vst [vmem:[#allocation2 + $0xa8] sm:$0xff] %v810
          %835 = vst [vmem:[#allocation2 + $0xb0] sm:$0xff] %v811
          %836 = vst [vmem:[#allocation2 + $0xb8] sm:$0xff] %v812
        $region52: #{tpu_custom_call.1} parent=35 // pred_fallthru
          _
        %p837 = scmp.gt.s32.totalorder %s22, 0
        // Predicated region
        $region53: #{tpu_custom_call.1} parent=35 // pred_check
          %p838 = pneg %p837
        $region54: #{tpu_custom_call.1} parent=35 // pred_check_branch
          %840 = sbr.rel (%p838) target = $region56
        $region55: #{tpu_custom_call.1} parent=35 // pred_region
          %v841 = vld [vmem:[#allocation2] sm:$0xff]
          %v842 = vld [vmem:[#allocation2 + $0x8] sm:$0xff]
          %v843 = vld [vmem:[#allocation2 + $0x10] sm:$0xff]
          %v844 = vld [vmem:[#allocation2 + $0x18] sm:$0xff]
          %v845 = vld [vmem:[#allocation2 + $0x20] sm:$0xff]
          %v846 = vld [vmem:[#allocation2 + $0x28] sm:$0xff]
          %v847 = vld [vmem:[#allocation2 + $0x30] sm:$0xff]
          %v848 = vld [vmem:[#allocation2 + $0x38] sm:$0xff]
          %v849 = vld [vmem:[#allocation2 + $0x40] sm:$0xff]
          %v850 = vld [vmem:[#allocation2 + $0x48] sm:$0xff]
          %v851 = vld [vmem:[#allocation2 + $0x50] sm:$0xff]
          %v852 = vld [vmem:[#allocation2 + $0x58] sm:$0xff]
          %v853 = vld [vmem:[#allocation2 + $0x60] sm:$0xff]
          %v854 = vld [vmem:[#allocation2 + $0x68] sm:$0xff]
          %v855 = vld [vmem:[#allocation2 + $0x70] sm:$0xff]
          %v856 = vld [vmem:[#allocation2 + $0x78] sm:$0xff]
          %v857 = vld [vmem:[#allocation2 + $0x80] sm:$0xff]
          %v858 = vld [vmem:[#allocation2 + $0x88] sm:$0xff]
          %v859 = vld [vmem:[#allocation2 + $0x90] sm:$0xff]
          %v860 = vld [vmem:[#allocation2 + $0x98] sm:$0xff]
          %v861 = vld [vmem:[#allocation2 + $0xa0] sm:$0xff]
          %v862 = vld [vmem:[#allocation2 + $0xa8] sm:$0xff]
          %v863 = vld [vmem:[#allocation2 + $0xb0] sm:$0xff]
          %v864 = vld [vmem:[#allocation2 + $0xb8] sm:$0xff]
          %v865 = vadd.f32 %v841, %v665
          %v866 = vadd.f32 %v842, %v667
          %v867 = vadd.f32 %v843, %v738
          %v868 = vadd.f32 %v844, %v669
          %v869 = vadd.f32 %v845, %v671
          %v870 = vadd.f32 %v846, %v741
          %v871 = vadd.f32 %v847, %v675
          %v872 = vadd.f32 %v848, %v677
          %v873 = vadd.f32 %v849, %v746
          %v874 = vadd.f32 %v850, %v679
          %v875 = vadd.f32 %v851, %v681
          %v876 = vadd.f32 %v852, %v749
          %v877 = vadd.f32 %v853, %v685
          %v878 = vadd.f32 %v854, %v687
          %v879 = vadd.f32 %v855, %v754
          %v880 = vadd.f32 %v856, %v689
          %v881 = vadd.f32 %v857, %v691
          %v882 = vadd.f32 %v858, %v757
          %v883 = vadd.f32 %v859, %v695
          %v884 = vadd.f32 %v860, %v697
          %v885 = vadd.f32 %v861, %v762
          %v886 = vadd.f32 %v862, %v699
          %v887 = vadd.f32 %v863, %v701
          %v888 = vadd.f32 %v864, %v765
          %889 = vst [vmem:[#allocation2] sm:$0xff] %v865
          %890 = vst [vmem:[#allocation2 + $0x8] sm:$0xff] %v866
          %891 = vst [vmem:[#allocation2 + $0x10] sm:$0xff] %v867
          %892 = vst [vmem:[#allocation2 + $0x18] sm:$0xff] %v868
          %893 = vst [vmem:[#allocation2 + $0x20] sm:$0xff] %v869
          %894 = vst [vmem:[#allocation2 + $0x28] sm:$0xff] %v870
          %895 = vst [vmem:[#allocation2 + $0x30] sm:$0xff] %v871
          %896 = vst [vmem:[#allocation2 + $0x38] sm:$0xff] %v872
          %897 = vst [vmem:[#allocation2 + $0x40] sm:$0xff] %v873
          %898 = vst [vmem:[#allocation2 + $0x48] sm:$0xff] %v874
          %899 = vst [vmem:[#allocation2 + $0x50] sm:$0xff] %v875
          %900 = vst [vmem:[#allocation2 + $0x58] sm:$0xff] %v876
          %901 = vst [vmem:[#allocation2 + $0x60] sm:$0xff] %v877
          %902 = vst [vmem:[#allocation2 + $0x68] sm:$0xff] %v878
          %903 = vst [vmem:[#allocation2 + $0x70] sm:$0xff] %v879
          %904 = vst [vmem:[#allocation2 + $0x78] sm:$0xff] %v880
          %905 = vst [vmem:[#allocation2 + $0x80] sm:$0xff] %v881
          %906 = vst [vmem:[#allocation2 + $0x88] sm:$0xff] %v882
          %907 = vst [vmem:[#allocation2 + $0x90] sm:$0xff] %v883
          %908 = vst [vmem:[#allocation2 + $0x98] sm:$0xff] %v884
          %909 = vst [vmem:[#allocation2 + $0xa0] sm:$0xff] %v885
          %910 = vst [vmem:[#allocation2 + $0xa8] sm:$0xff] %v886
          %911 = vst [vmem:[#allocation2 + $0xb0] sm:$0xff] %v887
          %912 = vst [vmem:[#allocation2 + $0xb8] sm:$0xff] %v888
        $region56: #{tpu_custom_call.1} parent=35 // pred_fallthru
          _
        %p913 = scmp.eq.s32.totalorder %s22, 1
        // Predicated region
        $region57: #{tpu_custom_call.1} parent=35 // pred_check
          %p914 = pneg %p913
        $region58: #{tpu_custom_call.1} parent=35 // pred_check_branch
          %916 = sbr.rel (%p914) target = $region60
        $region59: #{tpu_custom_call.1} parent=35 // pred_region
          %v917 = vld [vmem:[#allocation8] sm:$0xff]
          %v918 = vld [vmem:[#allocation8 + $0x8] sm:$0xf]
          %v919 = vld [vmem:[#allocation8 + $0xc] sm:$0xff]
          %v920 = vld [vmem:[#allocation8 + $0x14] sm:$0xf]
          %v921 = vld [vmem:[#allocation8 + $0x18] sm:$0xff]
          %v922 = vld [vmem:[#allocation8 + $0x20] sm:$0xf]
          %v923 = vld [vmem:[#allocation8 + $0x24] sm:$0xff]
          %v924 = vld [vmem:[#allocation8 + $0x2c] sm:$0xf]
          %v925 = vld [vmem:[#allocation8 + $0x30] sm:$0xff]
          %v926 = vld [vmem:[#allocation8 + $0x38] sm:$0xf]
          %v927 = vld [vmem:[#allocation8 + $0x3c] sm:$0xff]
          %v928 = vld [vmem:[#allocation8 + $0x44] sm:$0xf]
          %v929 = vld [vmem:[#allocation8 + $0x48] sm:$0xff]
          %v930 = vld [vmem:[#allocation8 + $0x50] sm:$0xf]
          %v931 = vld [vmem:[#allocation8 + $0x54] sm:$0xff]
          %v932 = vld [vmem:[#allocation8 + $0x5c] sm:$0xf]
          %v933 = vld [vmem:[#allocation8 + $0x60] sm:$0xff]
          %v934 = vld [vmem:[#allocation8 + $0x68] sm:$0xf]
          %v935 = vld [vmem:[#allocation8 + $0x6c] sm:$0xff]
          %v936 = vld [vmem:[#allocation8 + $0x74] sm:$0xf]
          %v937 = vld [vmem:[#allocation8 + $0x78] sm:$0xff]
          %v938 = vld [vmem:[#allocation8 + $0x80] sm:$0xf]
          %v939 = vld [vmem:[#allocation8 + $0x84] sm:$0xff]
          %v940 = vld [vmem:[#allocation8 + $0x8c] sm:$0xf]
          %v941 = vld [vmem:[#allocation8 + $0x90] sm:$0xff]
          %v942 = vld [vmem:[#allocation8 + $0x98] sm:$0xf]
          %v943 = vld [vmem:[#allocation8 + $0x9c] sm:$0xff]
          %v944 = vld [vmem:[#allocation8 + $0xa4] sm:$0xf]
          %v945 = vld [vmem:[#allocation8 + $0xa8] sm:$0xff]
          %v946 = vld [vmem:[#allocation8 + $0xb0] sm:$0xf]
          %v947 = vld [vmem:[#allocation8 + $0xb4] sm:$0xff]
          %v948 = vld [vmem:[#allocation8 + $0xbc] sm:$0xf]
          %v949 = vld [vmem:[%s3 + $0x3] sm:$0x1]
          %v950 = vld [vmem:[#allocation2] sm:$0xff]
          %v951 = vld [vmem:[#allocation2 + $0x8] sm:$0xff]
          %v952 = vld [vmem:[#allocation2 + $0x10] sm:$0xff]
          %v953 = vxor.u32 %v950, 2147483648
          %v954 = vmul.f32 %v953, 1.442695
          %v955 = vpow.pop %v954
          %v956 = vadd.f32 %v955, 1.0
          %v957 = vrcp.pop %v956
          %v958 = vmul.f32 1.0, %v957
          %v959 = vxor.u32 %v951, 2147483648
          %v960 = vmul.f32 %v959, 1.442695
          %v961 = vpow.pop %v960
          %v962 = vadd.f32 %v961, 1.0
          %v963 = vrcp.pop %v962
          %v964 = vmul.f32 1.0, %v963
          %v966 = vlaneseq
          %v967 = vshrl.u32 %v966, 7
          %v968 = vsub.s32 0, %v967
          %v969 = vrot.slane %v949, %v968
          %v971 = vmul.f32 %v958, %v969
          %v972 = vadd.f32 %v952, %v971
          %v973 = vtanh.pop %v972
          %v974 = vmul.f32 %v964, %v973
          %v975 = vsub.f32 %v973, %v974
          %v976 = vpack.c.bf16 %v975, %v975
          %v977 = vld [vmem:[#allocation2 + $0x18] sm:$0xff]
          %v978 = vld [vmem:[#allocation2 + $0x20] sm:$0xff]
          %v979 = vld [vmem:[#allocation2 + $0x28] sm:$0xff]
          %v1012 = vunpack.c.l.b16 %v917
          %v1013 = vunpack.c.h.b16 %v917
          %v1014 = vunpack.c.l.b16 %v918
          %v1015 = vunpack.c.l.b16 %v919
          %v1016 = vunpack.c.h.b16 %v919
          %v1017 = vunpack.c.l.b16 %v920
          %v1018 = vunpack.c.l.b16 %v921
          %v1019 = vunpack.c.h.b16 %v921
          %v1020 = vunpack.c.l.b16 %v922
          %v1021 = vunpack.c.l.b16 %v923
          %v1022 = vunpack.c.h.b16 %v923
          %v1023 = vunpack.c.l.b16 %v924
          %v1024 = vunpack.c.l.b16 %v925
          %v1025 = vunpack.c.h.b16 %v925
          %v1026 = vunpack.c.l.b16 %v926
          %v1027 = vunpack.c.l.b16 %v927
          %v1028 = vunpack.c.h.b16 %v927
          %v1029 = vunpack.c.l.b16 %v928
          %v1030 = vunpack.c.l.b16 %v929
          %v1031 = vunpack.c.h.b16 %v929
          %v1032 = vunpack.c.l.b16 %v930
          %v1033 = vunpack.c.l.b16 %v931
          %v1034 = vunpack.c.h.b16 %v931
          %v1035 = vunpack.c.l.b16 %v932
          %v1036 = vunpack.c.l.b16 %v933
          %v1037 = vunpack.c.h.b16 %v933
          %v1038 = vunpack.c.l.b16 %v934
          %v1039 = vunpack.c.l.b16 %v935
          %v1040 = vunpack.c.h.b16 %v935
          %v1041 = vunpack.c.l.b16 %v936
          %v1042 = vunpack.c.l.b16 %v937
          %v1043 = vunpack.c.h.b16 %v937
          %v1044 = vunpack.c.l.b16 %v938
          %v1045 = vunpack.c.l.b16 %v939
          %v1046 = vunpack.c.h.b16 %v939
          %v1047 = vunpack.c.l.b16 %v940
          %v1048 = vunpack.c.l.b16 %v941
          %v1049 = vunpack.c.h.b16 %v941
          %v1050 = vunpack.c.l.b16 %v942
          %v1051 = vunpack.c.l.b16 %v943
          %v1052 = vunpack.c.h.b16 %v943
          %v1053 = vunpack.c.l.b16 %v944
          %v1054 = vunpack.c.l.b16 %v945
          %v1055 = vunpack.c.h.b16 %v945
          %v1056 = vunpack.c.l.b16 %v946
          %v1057 = vunpack.c.l.b16 %v947
          %v1058 = vunpack.c.h.b16 %v947
          %v1059 = vunpack.c.l.b16 %v948
          %v1060 = vpack.c.b16 %v1015, %v1012
          %v1061 = vpack.c.b16 %v1016, %v1013
          %v1062 = vpack.c.b16 %v1017, %v1014
          %v1063 = vpack.c.b16 %v1021, %v1018
          %v1064 = vpack.c.b16 %v1022, %v1019
          %v1065 = vpack.c.b16 %v1023, %v1020
          %v1066 = vpack.c.b16 %v1027, %v1024
          %v1067 = vpack.c.b16 %v1028, %v1025
          %v1068 = vpack.c.b16 %v1029, %v1026
          %v1069 = vpack.c.b16 %v1033, %v1030
          %v1070 = vpack.c.b16 %v1034, %v1031
          %v1071 = vpack.c.b16 %v1035, %v1032
          %v1072 = vpack.c.b16 %v1039, %v1036
          %v1073 = vpack.c.b16 %v1040, %v1037
          %v1074 = vpack.c.b16 %v1041, %v1038
          %v1075 = vpack.c.b16 %v1045, %v1042
          %v1076 = vpack.c.b16 %v1046, %v1043
          %v1077 = vpack.c.b16 %v1047, %v1044
          %v1078 = vpack.c.b16 %v1051, %v1048
          %v1079 = vpack.c.b16 %v1052, %v1049
          %v1080 = vpack.c.b16 %v1053, %v1050
          %v1081 = vpack.c.b16 %v1057, %v1054
          %v1082 = vpack.c.b16 %v1058, %v1055
          %v1083 = vpack.c.b16 %v1059, %v1056
          %1108 = vmatprep.subr.bf16.mxu0 %v1082
          %1109 = vmatpush1.bf16.msra.mxu0 %v1081
          %1110 = vmatprep.subr.bf16.mxu0 %v1079
          %1111 = vmatpush1.bf16.msra.mxu0 %v1078
          %1112 = vmatprep.subr.bf16.mxu0 %v1076
          %1113 = vmatpush1.bf16.msra.mxu0 %v1075
          %1114 = vmatprep.subr.bf16.mxu0 %v1073
          %1115 = vmatpush1.bf16.msra.mxu0 %v1072
          %1116 = vmatprep.subr.bf16.mxu0 %v1070
          %1117 = vmatpush1.bf16.msra.mxu0 %v1069
          %1118 = vmatprep.subr.bf16.mxu0 %v1067
          %1119 = vmatpush1.bf16.msra.mxu0 %v1066
          %1120 = vmatprep.subr.bf16.mxu0 %v1064
          %1121 = vmatpush1.bf16.msra.mxu0 %v1063
          %1122 = vmatprep.subr.bf16.mxu0 %v1061
          %1123 = vmatpush1.bf16.msra.mxu0 %v1060
          %1124 = vmatprep.subr.bf16.mxu0 0
          %1125 = vmatpush2.bf16.msra.mxu0 0
          %1126 = vmatprep.subr.bf16.mxu0 0
          %1127 = vmatpush2.bf16.msra.mxu0 0
          %1128 = vmatprep.subr.bf16.mxu0 0
          %1129 = vmatpush2.bf16.msra.mxu0 0
          %1130 = vmatprep.subr.bf16.mxu0 0
          %1131 = vmatpush2.bf16.msra.mxu0 0
          %1132 = vmatprep.subr.bf16.mxu0 0
          %1133 = vmatpush2.bf16.msra.mxu0 0
          %1134 = vmatprep.subr.bf16.mxu0 0
          %1135 = vmatpush2.bf16.msra.mxu0 0
          %1136 = vmatprep.subr.bf16.mxu0 0
          %1137 = vmatpush2.bf16.msra.mxu0 0
          %1138 = vmatprep.subr.bf16.mxu0 0
          %1139 = vmatpush2.bf16.msra.mxu0 0
          %1140 = vmatprep.mubr.bf16.mxu0 0
          %1141 = vmatmul.mubr.bf16.gmra.mxu0 %v976
          %v1142 = vpop.f32.mrf.mxu0
          %v1143 = vadd.f32 0.0, %v1142
          %v1144 = vpop.f32.mrf.mxu0
          %v1145 = vadd.f32 0.0, %v1144
          %v1146 = vpop.f32.mrf.mxu0
          %v1147 = vpop.f32.mrf.mxu0
          %1148 = vdwg.mxu0
          %1149 = vmatprep.subr.bf16.mxu0 0
          %1150 = vmatpush1.bf16.msra.mxu0 %v1083
          %1151 = vmatprep.subr.bf16.mxu0 0
          %1152 = vmatpush1.bf16.msra.mxu0 %v1080
          %1153 = vmatprep.subr.bf16.mxu0 0
          %1154 = vmatpush1.bf16.msra.mxu0 %v1077
          %1155 = vmatprep.subr.bf16.mxu0 0
          %1156 = vmatpush1.bf16.msra.mxu0 %v1074
          %1157 = vmatprep.subr.bf16.mxu0 0
          %1158 = vmatpush1.bf16.msra.mxu0 %v1071
          %1159 = vmatprep.subr.bf16.mxu0 0
          %1160 = vmatpush1.bf16.msra.mxu0 %v1068
          %1161 = vmatprep.subr.bf16.mxu0 0
          %1162 = vmatpush1.bf16.msra.mxu0 %v1065
          %1163 = vmatprep.subr.bf16.mxu0 0
          %1164 = vmatpush1.bf16.msra.mxu0 %v1062
          %1165 = vmatprep.subr.bf16.mxu0 0
          %1166 = vmatpush2.bf16.msra.mxu0 0
          %1167 = vmatprep.subr.bf16.mxu0 0
          %1168 = vmatpush2.bf16.msra.mxu0 0
          %1169 = vmatprep.subr.bf16.mxu0 0
          %1170 = vmatpush2.bf16.msra.mxu0 0
          %1171 = vmatprep.subr.bf16.mxu0 0
          %1172 = vmatpush2.bf16.msra.mxu0 0
          %1173 = vmatprep.subr.bf16.mxu0 0
          %1174 = vmatpush2.bf16.msra.mxu0 0
          %1175 = vmatprep.subr.bf16.mxu0 0
          %1176 = vmatpush2.bf16.msra.mxu0 0
          %1177 = vmatprep.subr.bf16.mxu0 0
          %1178 = vmatpush2.bf16.msra.mxu0 0
          %1179 = vmatprep.subr.bf16.mxu0 0
          %1180 = vmatpush2.bf16.msra.mxu0 0
          %1181 = vmatprep.mubr.bf16.mxu0 0
          %1182 = vmatmul.mubr.bf16.gmra.mxu0 %v976
          %v1183 = vpop.f32.mrf.mxu0
          %v1184 = vadd.f32 0.0, %v1183
          %v1185 = vpop.f32.mrf.mxu0
          %v1186 = vpop.f32.mrf.mxu0
          %v1187 = vpop.f32.mrf.mxu0
          %1188 = vdwg.mxu0
          %v1189 = vadd.f32 %v977, %v1143
          %v1190 = vxor.u32 %v1189, 2147483648
          %v1191 = vmul.f32 %v1190, 1.442695
          %v1192 = vpow.pop %v1191
          %v1193 = vadd.f32 %v1192, 1.0
          %v1194 = vrcp.pop %v1193
          %v1195 = vmul.f32 1.0, %v1194
          %v1196 = vadd.f32 %v978, %v1145
          %v1197 = vxor.u32 %v1196, 2147483648
          %v1198 = vmul.f32 %v1197, 1.442695
          %v1199 = vpow.pop %v1198
          %v1200 = vadd.f32 %v1199, 1.0
          %v1201 = vrcp.pop %v1200
          %v1202 = vmul.f32 1.0, %v1201
          %v1203 = vadd.f32 %v1184, %v969
          %v1204 = vmul.f32 %v1195, %v1203
          %v1205 = vadd.f32 %v979, %v1204
          %v1206 = vtanh.pop %v1205
          %v1207 = vsub.f32 %v975, %v1206
          %v1208 = vmul.f32 %v1202, %v1207
          %v1209 = vadd.f32 %v1206, %v1208
          %v1210 = vpack.c.bf16 %v1209, %v1209
          %v1211 = vld [vmem:[#allocation2 + $0x30] sm:$0xff]
          %v1212 = vld [vmem:[#allocation2 + $0x38] sm:$0xff]
          %v1213 = vld [vmem:[#allocation2 + $0x40] sm:$0xff]
          %1214 = vmatprep.subr.bf16.mxu0 %v1082
          %1215 = vmatpush1.bf16.msra.mxu0 %v1081
          %1216 = vmatprep.subr.bf16.mxu0 %v1079
          %1217 = vmatpush1.bf16.msra.mxu0 %v1078
          %1218 = vmatprep.subr.bf16.mxu0 %v1076
          %1219 = vmatpush1.bf16.msra.mxu0 %v1075
          %1220 = vmatprep.subr.bf16.mxu0 %v1073
          %1221 = vmatpush1.bf16.msra.mxu0 %v1072
          %1222 = vmatprep.subr.bf16.mxu0 %v1070
          %1223 = vmatpush1.bf16.msra.mxu0 %v1069
          %1224 = vmatprep.subr.bf16.mxu0 %v1067
          %1225 = vmatpush1.bf16.msra.mxu0 %v1066
          %1226 = vmatprep.subr.bf16.mxu0 %v1064
          %1227 = vmatpush1.bf16.msra.mxu0 %v1063
          %1228 = vmatprep.subr.bf16.mxu0 %v1061
          %1229 = vmatpush1.bf16.msra.mxu0 %v1060
          %1230 = vmatprep.subr.bf16.mxu0 0
          %1231 = vmatpush2.bf16.msra.mxu0 0
          %1232 = vmatprep.subr.bf16.mxu0 0
          %1233 = vmatpush2.bf16.msra.mxu0 0
          %1234 = vmatprep.subr.bf16.mxu0 0
          %1235 = vmatpush2.bf16.msra.mxu0 0
          %1236 = vmatprep.subr.bf16.mxu0 0
          %1237 = vmatpush2.bf16.msra.mxu0 0
          %1238 = vmatprep.subr.bf16.mxu0 0
          %1239 = vmatpush2.bf16.msra.mxu0 0
          %1240 = vmatprep.subr.bf16.mxu0 0
          %1241 = vmatpush2.bf16.msra.mxu0 0
          %1242 = vmatprep.subr.bf16.mxu0 0
          %1243 = vmatpush2.bf16.msra.mxu0 0
          %1244 = vmatprep.subr.bf16.mxu0 0
          %1245 = vmatpush2.bf16.msra.mxu0 0
          %1246 = vmatprep.mubr.bf16.mxu0 0
          %1247 = vmatmul.mubr.bf16.gmra.mxu0 %v1210
          %v1248 = vpop.f32.mrf.mxu0
          %v1249 = vadd.f32 0.0, %v1248
          %v1250 = vpop.f32.mrf.mxu0
          %v1251 = vadd.f32 0.0, %v1250
          %v1252 = vpop.f32.mrf.mxu0
          %v1253 = vpop.f32.mrf.mxu0
          %1254 = vdwg.mxu0
          %1255 = vmatprep.subr.bf16.mxu0 0
          %1256 = vmatpush1.bf16.msra.mxu0 %v1083
          %1257 = vmatprep.subr.bf16.mxu0 0
          %1258 = vmatpush1.bf16.msra.mxu0 %v1080
          %1259 = vmatprep.subr.bf16.mxu0 0
          %1260 = vmatpush1.bf16.msra.mxu0 %v1077
          %1261 = vmatprep.subr.bf16.mxu0 0
          %1262 = vmatpush1.bf16.msra.mxu0 %v1074
          %1263 = vmatprep.subr.bf16.mxu0 0
          %1264 = vmatpush1.bf16.msra.mxu0 %v1071
          %1265 = vmatprep.subr.bf16.mxu0 0
          %1266 = vmatpush1.bf16.msra.mxu0 %v1068
          %1267 = vmatprep.subr.bf16.mxu0 0
          %1268 = vmatpush1.bf16.msra.mxu0 %v1065
          %1269 = vmatprep.subr.bf16.mxu0 0
          %1270 = vmatpush1.bf16.msra.mxu0 %v1062
          %1271 = vmatprep.subr.bf16.mxu0 0
          %1272 = vmatpush2.bf16.msra.mxu0 0
          %1273 = vmatprep.subr.bf16.mxu0 0
          %1274 = vmatpush2.bf16.msra.mxu0 0
          %1275 = vmatprep.subr.bf16.mxu0 0
          %1276 = vmatpush2.bf16.msra.mxu0 0
          %1277 = vmatprep.subr.bf16.mxu0 0
          %1278 = vmatpush2.bf16.msra.mxu0 0
          %1279 = vmatprep.subr.bf16.mxu0 0
          %1280 = vmatpush2.bf16.msra.mxu0 0
          %1281 = vmatprep.subr.bf16.mxu0 0
          %1282 = vmatpush2.bf16.msra.mxu0 0
          %1283 = vmatprep.subr.bf16.mxu0 0
          %1284 = vmatpush2.bf16.msra.mxu0 0
          %1285 = vmatprep.subr.bf16.mxu0 0
          %1286 = vmatpush2.bf16.msra.mxu0 0
          %1287 = vmatprep.mubr.bf16.mxu0 0
          %1288 = vmatmul.mubr.bf16.gmra.mxu0 %v1210
          %v1289 = vpop.f32.mrf.mxu0
          %v1290 = vadd.f32 0.0, %v1289
          %v1291 = vpop.f32.mrf.mxu0
          %v1292 = vpop.f32.mrf.mxu0
          %v1293 = vpop.f32.mrf.mxu0
          %1294 = vdwg.mxu0
          %v1295 = vadd.f32 %v1211, %v1249
          %v1296 = vxor.u32 %v1295, 2147483648
          %v1297 = vmul.f32 %v1296, 1.442695
          %v1298 = vpow.pop %v1297
          %v1299 = vadd.f32 %v1298, 1.0
          %v1300 = vrcp.pop %v1299
          %v1301 = vmul.f32 1.0, %v1300
          %v1302 = vadd.f32 %v1212, %v1251
          %v1303 = vxor.u32 %v1302, 2147483648
          %v1304 = vmul.f32 %v1303, 1.442695
          %v1305 = vpow.pop %v1304
          %v1306 = vadd.f32 %v1305, 1.0
          %v1307 = vrcp.pop %v1306
          %v1308 = vmul.f32 1.0, %v1307
          %v1309 = vadd.f32 %v1290, %v969
          %v1310 = vmul.f32 %v1301, %v1309
          %v1311 = vadd.f32 %v1213, %v1310
          %v1312 = vtanh.pop %v1311
          %v1313 = vsub.f32 %v1209, %v1312
          %v1314 = vmul.f32 %v1308, %v1313
          %v1315 = vadd.f32 %v1312, %v1314
          %v1316 = vpack.c.bf16 %v1315, %v1315
          %v1317 = vld [vmem:[#allocation2 + $0x48] sm:$0xff]
          %v1318 = vld [vmem:[#allocation2 + $0x50] sm:$0xff]
          %v1319 = vld [vmem:[#allocation2 + $0x58] sm:$0xff]
          %1320 = vmatprep.subr.bf16.mxu0 %v1082
          %1321 = vmatpush1.bf16.msra.mxu0 %v1081
          %1322 = vmatprep.subr.bf16.mxu0 %v1079
          %1323 = vmatpush1.bf16.msra.mxu0 %v1078
          %1324 = vmatprep.subr.bf16.mxu0 %v1076
          %1325 = vmatpush1.bf16.msra.mxu0 %v1075
          %1326 = vmatprep.subr.bf16.mxu0 %v1073
          %1327 = vmatpush1.bf16.msra.mxu0 %v1072
          %1328 = vmatprep.subr.bf16.mxu0 %v1070
          %1329 = vmatpush1.bf16.msra.mxu0 %v1069
          %1330 = vmatprep.subr.bf16.mxu0 %v1067
          %1331 = vmatpush1.bf16.msra.mxu0 %v1066
          %1332 = vmatprep.subr.bf16.mxu0 %v1064
          %1333 = vmatpush1.bf16.msra.mxu0 %v1063
          %1334 = vmatprep.subr.bf16.mxu0 %v1061
          %1335 = vmatpush1.bf16.msra.mxu0 %v1060
          %1336 = vmatprep.subr.bf16.mxu0 0
          %1337 = vmatpush2.bf16.msra.mxu0 0
          %1338 = vmatprep.subr.bf16.mxu0 0
          %1339 = vmatpush2.bf16.msra.mxu0 0
          %1340 = vmatprep.subr.bf16.mxu0 0
          %1341 = vmatpush2.bf16.msra.mxu0 0
          %1342 = vmatprep.subr.bf16.mxu0 0
          %1343 = vmatpush2.bf16.msra.mxu0 0
          %1344 = vmatprep.subr.bf16.mxu0 0
          %1345 = vmatpush2.bf16.msra.mxu0 0
          %1346 = vmatprep.subr.bf16.mxu0 0
          %1347 = vmatpush2.bf16.msra.mxu0 0
          %1348 = vmatprep.subr.bf16.mxu0 0
          %1349 = vmatpush2.bf16.msra.mxu0 0
          %1350 = vmatprep.subr.bf16.mxu0 0
          %1351 = vmatpush2.bf16.msra.mxu0 0
          %1352 = vmatprep.mubr.bf16.mxu0 0
          %1353 = vmatmul.mubr.bf16.gmra.mxu0 %v1316
          %v1354 = vpop.f32.mrf.mxu0
          %v1355 = vadd.f32 0.0, %v1354
          %v1356 = vpop.f32.mrf.mxu0
          %v1357 = vadd.f32 0.0, %v1356
          %v1358 = vpop.f32.mrf.mxu0
          %v1359 = vpop.f32.mrf.mxu0
          %1360 = vdwg.mxu0
          %1361 = vmatprep.subr.bf16.mxu0 0
          %1362 = vmatpush1.bf16.msra.mxu0 %v1083
          %1363 = vmatprep.subr.bf16.mxu0 0
          %1364 = vmatpush1.bf16.msra.mxu0 %v1080
          %1365 = vmatprep.subr.bf16.mxu0 0
          %1366 = vmatpush1.bf16.msra.mxu0 %v1077
          %1367 = vmatprep.subr.bf16.mxu0 0
          %1368 = vmatpush1.bf16.msra.mxu0 %v1074
          %1369 = vmatprep.subr.bf16.mxu0 0
          %1370 = vmatpush1.bf16.msra.mxu0 %v1071
          %1371 = vmatprep.subr.bf16.mxu0 0
          %1372 = vmatpush1.bf16.msra.mxu0 %v1068
          %1373 = vmatprep.subr.bf16.mxu0 0
          %1374 = vmatpush1.bf16.msra.mxu0 %v1065
          %1375 = vmatprep.subr.bf16.mxu0 0
          %1376 = vmatpush1.bf16.msra.mxu0 %v1062
          %1377 = vmatprep.subr.bf16.mxu0 0
          %1378 = vmatpush2.bf16.msra.mxu0 0
          %1379 = vmatprep.subr.bf16.mxu0 0
          %1380 = vmatpush2.bf16.msra.mxu0 0
          %1381 = vmatprep.subr.bf16.mxu0 0
          %1382 = vmatpush2.bf16.msra.mxu0 0
          %1383 = vmatprep.subr.bf16.mxu0 0
          %1384 = vmatpush2.bf16.msra.mxu0 0
          %1385 = vmatprep.subr.bf16.mxu0 0
          %1386 = vmatpush2.bf16.msra.mxu0 0
          %1387 = vmatprep.subr.bf16.mxu0 0
          %1388 = vmatpush2.bf16.msra.mxu0 0
          %1389 = vmatprep.subr.bf16.mxu0 0
          %1390 = vmatpush2.bf16.msra.mxu0 0
          %1391 = vmatprep.subr.bf16.mxu0 0
          %1392 = vmatpush2.bf16.msra.mxu0 0
          %1393 = vmatprep.mubr.bf16.mxu0 0
          %1394 = vmatmul.mubr.bf16.gmra.mxu0 %v1316
          %v1395 = vpop.f32.mrf.mxu0
          %v1396 = vadd.f32 0.0, %v1395
          %v1397 = vpop.f32.mrf.mxu0
          %v1398 = vpop.f32.mrf.mxu0
          %v1399 = vpop.f32.mrf.mxu0
          %1400 = vdwg.mxu0
          %v1401 = vadd.f32 %v1317, %v1355
          %v1402 = vxor.u32 %v1401, 2147483648
          %v1403 = vmul.f32 %v1402, 1.442695
          %v1404 = vpow.pop %v1403
          %v1405 = vadd.f32 %v1404, 1.0
          %v1406 = vrcp.pop %v1405
          %v1407 = vmul.f32 1.0, %v1406
          %v1408 = vadd.f32 %v1318, %v1357
          %v1409 = vxor.u32 %v1408, 2147483648
          %v1410 = vmul.f32 %v1409, 1.442695
          %v1411 = vpow.pop %v1410
          %v1412 = vadd.f32 %v1411, 1.0
          %v1413 = vrcp.pop %v1412
          %v1414 = vmul.f32 1.0, %v1413
          %v1415 = vadd.f32 %v1396, %v969
          %v1416 = vmul.f32 %v1407, %v1415
          %v1417 = vadd.f32 %v1319, %v1416
          %v1418 = vtanh.pop %v1417
          %v1419 = vsub.f32 %v1315, %v1418
          %v1420 = vmul.f32 %v1414, %v1419
          %v1421 = vadd.f32 %v1418, %v1420
          %v1422 = vpack.c.bf16 %v1421, %v1421
          %v1423 = vld [vmem:[#allocation2 + $0x60] sm:$0xff]
          %v1424 = vld [vmem:[#allocation2 + $0x68] sm:$0xff]
          %v1425 = vld [vmem:[#allocation2 + $0x70] sm:$0xff]
          %1426 = vmatprep.subr.bf16.mxu0 %v1082
          %1427 = vmatpush1.bf16.msra.mxu0 %v1081
          %1428 = vmatprep.subr.bf16.mxu0 %v1079
          %1429 = vmatpush1.bf16.msra.mxu0 %v1078
          %1430 = vmatprep.subr.bf16.mxu0 %v1076
          %1431 = vmatpush1.bf16.msra.mxu0 %v1075
          %1432 = vmatprep.subr.bf16.mxu0 %v1073
          %1433 = vmatpush1.bf16.msra.mxu0 %v1072
          %1434 = vmatprep.subr.bf16.mxu0 %v1070
          %1435 = vmatpush1.bf16.msra.mxu0 %v1069
          %1436 = vmatprep.subr.bf16.mxu0 %v1067
          %1437 = vmatpush1.bf16.msra.mxu0 %v1066
          %1438 = vmatprep.subr.bf16.mxu0 %v1064
          %1439 = vmatpush1.bf16.msra.mxu0 %v1063
          %1440 = vmatprep.subr.bf16.mxu0 %v1061
          %1441 = vmatpush1.bf16.msra.mxu0 %v1060
          %1442 = vmatprep.subr.bf16.mxu0 0
          %1443 = vmatpush2.bf16.msra.mxu0 0
          %1444 = vmatprep.subr.bf16.mxu0 0
          %1445 = vmatpush2.bf16.msra.mxu0 0
          %1446 = vmatprep.subr.bf16.mxu0 0
          %1447 = vmatpush2.bf16.msra.mxu0 0
          %1448 = vmatprep.subr.bf16.mxu0 0
          %1449 = vmatpush2.bf16.msra.mxu0 0
          %1450 = vmatprep.subr.bf16.mxu0 0
          %1451 = vmatpush2.bf16.msra.mxu0 0
          %1452 = vmatprep.subr.bf16.mxu0 0
          %1453 = vmatpush2.bf16.msra.mxu0 0
          %1454 = vmatprep.subr.bf16.mxu0 0
          %1455 = vmatpush2.bf16.msra.mxu0 0
          %1456 = vmatprep.subr.bf16.mxu0 0
          %1457 = vmatpush2.bf16.msra.mxu0 0
          %1458 = vmatprep.mubr.bf16.mxu0 0
          %1459 = vmatmul.mubr.bf16.gmra.mxu0 %v1422
          %v1460 = vpop.f32.mrf.mxu0
          %v1461 = vadd.f32 0.0, %v1460
          %v1462 = vpop.f32.mrf.mxu0
          %v1463 = vadd.f32 0.0, %v1462
          %v1464 = vpop.f32.mrf.mxu0
          %v1465 = vpop.f32.mrf.mxu0
          %1466 = vdwg.mxu0
          %1467 = vmatprep.subr.bf16.mxu0 0
          %1468 = vmatpush1.bf16.msra.mxu0 %v1083
          %1469 = vmatprep.subr.bf16.mxu0 0
          %1470 = vmatpush1.bf16.msra.mxu0 %v1080
          %1471 = vmatprep.subr.bf16.mxu0 0
          %1472 = vmatpush1.bf16.msra.mxu0 %v1077
          %1473 = vmatprep.subr.bf16.mxu0 0
          %1474 = vmatpush1.bf16.msra.mxu0 %v1074
          %1475 = vmatprep.subr.bf16.mxu0 0
          %1476 = vmatpush1.bf16.msra.mxu0 %v1071
          %1477 = vmatprep.subr.bf16.mxu0 0
          %1478 = vmatpush1.bf16.msra.mxu0 %v1068
          %1479 = vmatprep.subr.bf16.mxu0 0
          %1480 = vmatpush1.bf16.msra.mxu0 %v1065
          %1481 = vmatprep.subr.bf16.mxu0 0
          %1482 = vmatpush1.bf16.msra.mxu0 %v1062
          %1483 = vmatprep.subr.bf16.mxu0 0
          %1484 = vmatpush2.bf16.msra.mxu0 0
          %1485 = vmatprep.subr.bf16.mxu0 0
          %1486 = vmatpush2.bf16.msra.mxu0 0
          %1487 = vmatprep.subr.bf16.mxu0 0
          %1488 = vmatpush2.bf16.msra.mxu0 0
          %1489 = vmatprep.subr.bf16.mxu0 0
          %1490 = vmatpush2.bf16.msra.mxu0 0
          %1491 = vmatprep.subr.bf16.mxu0 0
          %1492 = vmatpush2.bf16.msra.mxu0 0
          %1493 = vmatprep.subr.bf16.mxu0 0
          %1494 = vmatpush2.bf16.msra.mxu0 0
          %1495 = vmatprep.subr.bf16.mxu0 0
          %1496 = vmatpush2.bf16.msra.mxu0 0
          %1497 = vmatprep.subr.bf16.mxu0 0
          %1498 = vmatpush2.bf16.msra.mxu0 0
          %1499 = vmatprep.mubr.bf16.mxu0 0
          %1500 = vmatmul.mubr.bf16.gmra.mxu0 %v1422
          %v1501 = vpop.f32.mrf.mxu0
          %v1502 = vadd.f32 0.0, %v1501
          %v1503 = vpop.f32.mrf.mxu0
          %v1504 = vpop.f32.mrf.mxu0
          %v1505 = vpop.f32.mrf.mxu0
          %1506 = vdwg.mxu0
          %v1507 = vadd.f32 %v1423, %v1461
          %v1508 = vxor.u32 %v1507, 2147483648
          %v1509 = vmul.f32 %v1508, 1.442695
          %v1510 = vpow.pop %v1509
          %v1511 = vadd.f32 %v1510, 1.0
          %v1512 = vrcp.pop %v1511
          %v1513 = vmul.f32 1.0, %v1512
          %v1514 = vadd.f32 %v1424, %v1463
          %v1515 = vxor.u32 %v1514, 2147483648
          %v1516 = vmul.f32 %v1515, 1.442695
          %v1517 = vpow.pop %v1516
          %v1518 = vadd.f32 %v1517, 1.0
          %v1519 = vrcp.pop %v1518
          %v1520 = vmul.f32 1.0, %v1519
          %v1521 = vadd.f32 %v1502, %v969
          %v1522 = vmul.f32 %v1513, %v1521
          %v1523 = vadd.f32 %v1425, %v1522
          %v1524 = vtanh.pop %v1523
          %v1525 = vsub.f32 %v1421, %v1524
          %v1526 = vmul.f32 %v1520, %v1525
          %v1527 = vadd.f32 %v1524, %v1526
          %v1528 = vpack.c.bf16 %v1527, %v1527
          %v1529 = vld [vmem:[#allocation2 + $0x78] sm:$0xff]
          %v1530 = vld [vmem:[#allocation2 + $0x80] sm:$0xff]
          %v1531 = vld [vmem:[#allocation2 + $0x88] sm:$0xff]
          %1532 = vmatprep.subr.bf16.mxu0 %v1082
          %1533 = vmatpush1.bf16.msra.mxu0 %v1081
          %1534 = vmatprep.subr.bf16.mxu0 %v1079
          %1535 = vmatpush1.bf16.msra.mxu0 %v1078
          %1536 = vmatprep.subr.bf16.mxu0 %v1076
          %1537 = vmatpush1.bf16.msra.mxu0 %v1075
          %1538 = vmatprep.subr.bf16.mxu0 %v1073
          %1539 = vmatpush1.bf16.msra.mxu0 %v1072
          %1540 = vmatprep.subr.bf16.mxu0 %v1070
          %1541 = vmatpush1.bf16.msra.mxu0 %v1069
          %1542 = vmatprep.subr.bf16.mxu0 %v1067
          %1543 = vmatpush1.bf16.msra.mxu0 %v1066
          %1544 = vmatprep.subr.bf16.mxu0 %v1064
          %1545 = vmatpush1.bf16.msra.mxu0 %v1063
          %1546 = vmatprep.subr.bf16.mxu0 %v1061
          %1547 = vmatpush1.bf16.msra.mxu0 %v1060
          %1548 = vmatprep.subr.bf16.mxu0 0
          %1549 = vmatpush2.bf16.msra.mxu0 0
          %1550 = vmatprep.subr.bf16.mxu0 0
          %1551 = vmatpush2.bf16.msra.mxu0 0
          %1552 = vmatprep.subr.bf16.mxu0 0
          %1553 = vmatpush2.bf16.msra.mxu0 0
          %1554 = vmatprep.subr.bf16.mxu0 0
          %1555 = vmatpush2.bf16.msra.mxu0 0
          %1556 = vmatprep.subr.bf16.mxu0 0
          %1557 = vmatpush2.bf16.msra.mxu0 0
          %1558 = vmatprep.subr.bf16.mxu0 0
          %1559 = vmatpush2.bf16.msra.mxu0 0
          %1560 = vmatprep.subr.bf16.mxu0 0
          %1561 = vmatpush2.bf16.msra.mxu0 0
          %1562 = vmatprep.subr.bf16.mxu0 0
          %1563 = vmatpush2.bf16.msra.mxu0 0
          %1564 = vmatprep.mubr.bf16.mxu0 0
          %1565 = vmatmul.mubr.bf16.gmra.mxu0 %v1528
          %v1566 = vpop.f32.mrf.mxu0
          %v1567 = vadd.f32 0.0, %v1566
          %v1568 = vpop.f32.mrf.mxu0
          %v1569 = vadd.f32 0.0, %v1568
          %v1570 = vpop.f32.mrf.mxu0
          %v1571 = vpop.f32.mrf.mxu0
          %1572 = vdwg.mxu0
          %1573 = vmatprep.subr.bf16.mxu0 0
          %1574 = vmatpush1.bf16.msra.mxu0 %v1083
          %1575 = vmatprep.subr.bf16.mxu0 0
          %1576 = vmatpush1.bf16.msra.mxu0 %v1080
          %1577 = vmatprep.subr.bf16.mxu0 0
          %1578 = vmatpush1.bf16.msra.mxu0 %v1077
          %1579 = vmatprep.subr.bf16.mxu0 0
          %1580 = vmatpush1.bf16.msra.mxu0 %v1074
          %1581 = vmatprep.subr.bf16.mxu0 0
          %1582 = vmatpush1.bf16.msra.mxu0 %v1071
          %1583 = vmatprep.subr.bf16.mxu0 0
          %1584 = vmatpush1.bf16.msra.mxu0 %v1068
          %1585 = vmatprep.subr.bf16.mxu0 0
          %1586 = vmatpush1.bf16.msra.mxu0 %v1065
          %1587 = vmatprep.subr.bf16.mxu0 0
          %1588 = vmatpush1.bf16.msra.mxu0 %v1062
          %1589 = vmatprep.subr.bf16.mxu0 0
          %1590 = vmatpush2.bf16.msra.mxu0 0
          %1591 = vmatprep.subr.bf16.mxu0 0
          %1592 = vmatpush2.bf16.msra.mxu0 0
          %1593 = vmatprep.subr.bf16.mxu0 0
          %1594 = vmatpush2.bf16.msra.mxu0 0
          %1595 = vmatprep.subr.bf16.mxu0 0
          %1596 = vmatpush2.bf16.msra.mxu0 0
          %1597 = vmatprep.subr.bf16.mxu0 0
          %1598 = vmatpush2.bf16.msra.mxu0 0
          %1599 = vmatprep.subr.bf16.mxu0 0
          %1600 = vmatpush2.bf16.msra.mxu0 0
          %1601 = vmatprep.subr.bf16.mxu0 0
          %1602 = vmatpush2.bf16.msra.mxu0 0
          %1603 = vmatprep.subr.bf16.mxu0 0
          %1604 = vmatpush2.bf16.msra.mxu0 0
          %1605 = vmatprep.mubr.bf16.mxu0 0
          %1606 = vmatmul.mubr.bf16.gmra.mxu0 %v1528
          %v1607 = vpop.f32.mrf.mxu0
          %v1608 = vadd.f32 0.0, %v1607
          %v1609 = vpop.f32.mrf.mxu0
          %v1610 = vpop.f32.mrf.mxu0
          %v1611 = vpop.f32.mrf.mxu0
          %1612 = vdwg.mxu0
          %v1613 = vadd.f32 %v1529, %v1567
          %v1614 = vxor.u32 %v1613, 2147483648
          %v1615 = vmul.f32 %v1614, 1.442695
          %v1616 = vpow.pop %v1615
          %v1617 = vadd.f32 %v1616, 1.0
          %v1618 = vrcp.pop %v1617
          %v1619 = vmul.f32 1.0, %v1618
          %v1620 = vadd.f32 %v1530, %v1569
          %v1621 = vxor.u32 %v1620, 2147483648
          %v1622 = vmul.f32 %v1621, 1.442695
          %v1623 = vpow.pop %v1622
          %v1624 = vadd.f32 %v1623, 1.0
          %v1625 = vrcp.pop %v1624
          %v1626 = vmul.f32 1.0, %v1625
          %v1627 = vadd.f32 %v1608, %v969
          %v1628 = vmul.f32 %v1619, %v1627
          %v1629 = vadd.f32 %v1531, %v1628
          %v1630 = vtanh.pop %v1629
          %v1631 = vsub.f32 %v1527, %v1630
          %v1632 = vmul.f32 %v1626, %v1631
          %v1633 = vadd.f32 %v1630, %v1632
          %v1634 = vpack.c.bf16 %v1633, %v1633
          %v1635 = vld [vmem:[#allocation2 + $0x90] sm:$0xff]
          %v1636 = vld [vmem:[#allocation2 + $0x98] sm:$0xff]
          %v1637 = vld [vmem:[#allocation2 + $0xa0] sm:$0xff]
          %1638 = vmatprep.subr.bf16.mxu0 %v1082
          %1639 = vmatpush1.bf16.msra.mxu0 %v1081
          %1640 = vmatprep.subr.bf16.mxu0 %v1079
          %1641 = vmatpush1.bf16.msra.mxu0 %v1078
          %1642 = vmatprep.subr.bf16.mxu0 %v1076
          %1643 = vmatpush1.bf16.msra.mxu0 %v1075
          %1644 = vmatprep.subr.bf16.mxu0 %v1073
          %1645 = vmatpush1.bf16.msra.mxu0 %v1072
          %1646 = vmatprep.subr.bf16.mxu0 %v1070
          %1647 = vmatpush1.bf16.msra.mxu0 %v1069
          %1648 = vmatprep.subr.bf16.mxu0 %v1067
          %1649 = vmatpush1.bf16.msra.mxu0 %v1066
          %1650 = vmatprep.subr.bf16.mxu0 %v1064
          %1651 = vmatpush1.bf16.msra.mxu0 %v1063
          %1652 = vmatprep.subr.bf16.mxu0 %v1061
          %1653 = vmatpush1.bf16.msra.mxu0 %v1060
          %1654 = vmatprep.subr.bf16.mxu0 0
          %1655 = vmatpush2.bf16.msra.mxu0 0
          %1656 = vmatprep.subr.bf16.mxu0 0
          %1657 = vmatpush2.bf16.msra.mxu0 0
          %1658 = vmatprep.subr.bf16.mxu0 0
          %1659 = vmatpush2.bf16.msra.mxu0 0
          %1660 = vmatprep.subr.bf16.mxu0 0
          %1661 = vmatpush2.bf16.msra.mxu0 0
          %1662 = vmatprep.subr.bf16.mxu0 0
          %1663 = vmatpush2.bf16.msra.mxu0 0
          %1664 = vmatprep.subr.bf16.mxu0 0
          %1665 = vmatpush2.bf16.msra.mxu0 0
          %1666 = vmatprep.subr.bf16.mxu0 0
          %1667 = vmatpush2.bf16.msra.mxu0 0
          %1668 = vmatprep.subr.bf16.mxu0 0
          %1669 = vmatpush2.bf16.msra.mxu0 0
          %1670 = vmatprep.mubr.bf16.mxu0 0
          %1671 = vmatmul.mubr.bf16.gmra.mxu0 %v1634
          %v1672 = vpop.f32.mrf.mxu0
          %v1673 = vadd.f32 0.0, %v1672
          %v1674 = vpop.f32.mrf.mxu0
          %v1675 = vadd.f32 0.0, %v1674
          %v1676 = vpop.f32.mrf.mxu0
          %v1677 = vpop.f32.mrf.mxu0
          %1678 = vdwg.mxu0
          %1679 = vmatprep.subr.bf16.mxu0 0
          %1680 = vmatpush1.bf16.msra.mxu0 %v1083
          %1681 = vmatprep.subr.bf16.mxu0 0
          %1682 = vmatpush1.bf16.msra.mxu0 %v1080
          %1683 = vmatprep.subr.bf16.mxu0 0
          %1684 = vmatpush1.bf16.msra.mxu0 %v1077
          %1685 = vmatprep.subr.bf16.mxu0 0
          %1686 = vmatpush1.bf16.msra.mxu0 %v1074
          %1687 = vmatprep.subr.bf16.mxu0 0
          %1688 = vmatpush1.bf16.msra.mxu0 %v1071
          %1689 = vmatprep.subr.bf16.mxu0 0
          %1690 = vmatpush1.bf16.msra.mxu0 %v1068
          %1691 = vmatprep.subr.bf16.mxu0 0
          %1692 = vmatpush1.bf16.msra.mxu0 %v1065
          %1693 = vmatprep.subr.bf16.mxu0 0
          %1694 = vmatpush1.bf16.msra.mxu0 %v1062
          %1695 = vmatprep.subr.bf16.mxu0 0
          %1696 = vmatpush2.bf16.msra.mxu0 0
          %1697 = vmatprep.subr.bf16.mxu0 0
          %1698 = vmatpush2.bf16.msra.mxu0 0
          %1699 = vmatprep.subr.bf16.mxu0 0
          %1700 = vmatpush2.bf16.msra.mxu0 0
          %1701 = vmatprep.subr.bf16.mxu0 0
          %1702 = vmatpush2.bf16.msra.mxu0 0
          %1703 = vmatprep.subr.bf16.mxu0 0
          %1704 = vmatpush2.bf16.msra.mxu0 0
          %1705 = vmatprep.subr.bf16.mxu0 0
          %1706 = vmatpush2.bf16.msra.mxu0 0
          %1707 = vmatprep.subr.bf16.mxu0 0
          %1708 = vmatpush2.bf16.msra.mxu0 0
          %1709 = vmatprep.subr.bf16.mxu0 0
          %1710 = vmatpush2.bf16.msra.mxu0 0
          %1711 = vmatprep.mubr.bf16.mxu0 0
          %1712 = vmatmul.mubr.bf16.gmra.mxu0 %v1634
          %v1713 = vpop.f32.mrf.mxu0
          %v1714 = vadd.f32 0.0, %v1713
          %v1715 = vpop.f32.mrf.mxu0
          %v1716 = vpop.f32.mrf.mxu0
          %v1717 = vpop.f32.mrf.mxu0
          %1718 = vdwg.mxu0
          %v1719 = vadd.f32 %v1635, %v1673
          %v1720 = vxor.u32 %v1719, 2147483648
          %v1721 = vmul.f32 %v1720, 1.442695
          %v1722 = vpow.pop %v1721
          %v1723 = vadd.f32 %v1722, 1.0
          %v1724 = vrcp.pop %v1723
          %v1725 = vmul.f32 1.0, %v1724
          %v1726 = vadd.f32 %v1636, %v1675
          %v1727 = vxor.u32 %v1726, 2147483648
          %v1728 = vmul.f32 %v1727, 1.442695
          %v1729 = vpow.pop %v1728
          %v1730 = vadd.f32 %v1729, 1.0
          %v1731 = vrcp.pop %v1730
          %v1732 = vmul.f32 1.0, %v1731
          %v1733 = vadd.f32 %v1714, %v969
          %v1734 = vmul.f32 %v1725, %v1733
          %v1735 = vadd.f32 %v1637, %v1734
          %v1736 = vtanh.pop %v1735
          %v1737 = vsub.f32 %v1633, %v1736
          %v1738 = vmul.f32 %v1732, %v1737
          %v1739 = vadd.f32 %v1736, %v1738
          %v1740 = vpack.c.bf16 %v1739, %v1739
          %v1741 = vld [vmem:[#allocation2 + $0xa8] sm:$0xff]
          %v1742 = vld [vmem:[#allocation2 + $0xb0] sm:$0xff]
          %v1743 = vld [vmem:[#allocation2 + $0xb8] sm:$0xff]
          %1744 = vmatprep.subr.bf16.mxu0 %v1082
          %1745 = vmatpush1.bf16.msra.mxu0 %v1081
          %1746 = vmatprep.subr.bf16.mxu0 %v1079
          %1747 = vmatpush1.bf16.msra.mxu0 %v1078
          %1748 = vmatprep.subr.bf16.mxu0 %v1076
          %1749 = vmatpush1.bf16.msra.mxu0 %v1075
          %1750 = vmatprep.subr.bf16.mxu0 %v1073
          %1751 = vmatpush1.bf16.msra.mxu0 %v1072
          %1752 = vmatprep.subr.bf16.mxu0 %v1070
          %1753 = vmatpush1.bf16.msra.mxu0 %v1069
          %1754 = vmatprep.subr.bf16.mxu0 %v1067
          %1755 = vmatpush1.bf16.msra.mxu0 %v1066
          %1756 = vmatprep.subr.bf16.mxu0 %v1064
          %1757 = vmatpush1.bf16.msra.mxu0 %v1063
          %1758 = vmatprep.subr.bf16.mxu0 %v1061
          %1759 = vmatpush1.bf16.msra.mxu0 %v1060
          %1760 = vmatprep.subr.bf16.mxu0 0
          %1761 = vmatpush2.bf16.msra.mxu0 0
          %1762 = vmatprep.subr.bf16.mxu0 0
          %1763 = vmatpush2.bf16.msra.mxu0 0
          %1764 = vmatprep.subr.bf16.mxu0 0
          %1765 = vmatpush2.bf16.msra.mxu0 0
          %1766 = vmatprep.subr.bf16.mxu0 0
          %1767 = vmatpush2.bf16.msra.mxu0 0
          %1768 = vmatprep.subr.bf16.mxu0 0
          %1769 = vmatpush2.bf16.msra.mxu0 0
          %1770 = vmatprep.subr.bf16.mxu0 0
          %1771 = vmatpush2.bf16.msra.mxu0 0
          %1772 = vmatprep.subr.bf16.mxu0 0
          %1773 = vmatpush2.bf16.msra.mxu0 0
          %1774 = vmatprep.subr.bf16.mxu0 0
          %1775 = vmatpush2.bf16.msra.mxu0 0
          %1776 = vmatprep.mubr.bf16.mxu0 0
          %1777 = vmatmul.mubr.bf16.gmra.mxu0 %v1740
          %v1778 = vpop.f32.mrf.mxu0
          %v1779 = vadd.f32 0.0, %v1778
          %v1780 = vpop.f32.mrf.mxu0
          %v1781 = vadd.f32 0.0, %v1780
          %v1782 = vpop.f32.mrf.mxu0
          %v1783 = vpop.f32.mrf.mxu0
          %1784 = vdwg.mxu0
          %1785 = vmatprep.subr.bf16.mxu0 0
          %1786 = vmatpush1.bf16.msra.mxu0 %v1083
          %1787 = vmatprep.subr.bf16.mxu0 0
          %1788 = vmatpush1.bf16.msra.mxu0 %v1080
          %1789 = vmatprep.subr.bf16.mxu0 0
          %1790 = vmatpush1.bf16.msra.mxu0 %v1077
          %1791 = vmatprep.subr.bf16.mxu0 0
          %1792 = vmatpush1.bf16.msra.mxu0 %v1074
          %1793 = vmatprep.subr.bf16.mxu0 0
          %1794 = vmatpush1.bf16.msra.mxu0 %v1071
          %1795 = vmatprep.subr.bf16.mxu0 0
          %1796 = vmatpush1.bf16.msra.mxu0 %v1068
          %1797 = vmatprep.subr.bf16.mxu0 0
          %1798 = vmatpush1.bf16.msra.mxu0 %v1065
          %1799 = vmatprep.subr.bf16.mxu0 0
          %1800 = vmatpush1.bf16.msra.mxu0 %v1062
          %1801 = vmatprep.subr.bf16.mxu0 0
          %1802 = vmatpush2.bf16.msra.mxu0 0
          %1803 = vmatprep.subr.bf16.mxu0 0
          %1804 = vmatpush2.bf16.msra.mxu0 0
          %1805 = vmatprep.subr.bf16.mxu0 0
          %1806 = vmatpush2.bf16.msra.mxu0 0
          %1807 = vmatprep.subr.bf16.mxu0 0
          %1808 = vmatpush2.bf16.msra.mxu0 0
          %1809 = vmatprep.subr.bf16.mxu0 0
          %1810 = vmatpush2.bf16.msra.mxu0 0
          %1811 = vmatprep.subr.bf16.mxu0 0
          %1812 = vmatpush2.bf16.msra.mxu0 0
          %1813 = vmatprep.subr.bf16.mxu0 0
          %1814 = vmatpush2.bf16.msra.mxu0 0
          %1815 = vmatprep.subr.bf16.mxu0 0
          %1816 = vmatpush2.bf16.msra.mxu0 0
          %1817 = vmatprep.mubr.bf16.mxu0 0
          %1818 = vmatmul.mubr.bf16.gmra.mxu0 %v1740
          %v1819 = vpop.f32.mrf.mxu0
          %v1820 = vadd.f32 0.0, %v1819
          %v1821 = vpop.f32.mrf.mxu0
          %v1822 = vpop.f32.mrf.mxu0
          %v1823 = vpop.f32.mrf.mxu0
          %1824 = vdwg.mxu0
          %v1825 = vadd.f32 %v1741, %v1779
          %v1826 = vxor.u32 %v1825, 2147483648
          %v1827 = vmul.f32 %v1826, 1.442695
          %v1828 = vpow.pop %v1827
          %v1829 = vadd.f32 %v1828, 1.0
          %v1830 = vrcp.pop %v1829
          %v1831 = vmul.f32 1.0, %v1830
          %v1832 = vadd.f32 %v1742, %v1781
          %v1833 = vxor.u32 %v1832, 2147483648
          %v1834 = vmul.f32 %v1833, 1.442695
          %v1835 = vpow.pop %v1834
          %v1836 = vadd.f32 %v1835, 1.0
          %v1837 = vrcp.pop %v1836
          %v1838 = vmul.f32 1.0, %v1837
          %v1839 = vadd.f32 %v1820, %v969
          %v1840 = vmul.f32 %v1831, %v1839
          %v1841 = vadd.f32 %v1743, %v1840
          %v1842 = vtanh.pop %v1841
          %v1843 = vsub.f32 %v1739, %v1842
          %v1844 = vmul.f32 %v1838, %v1843
          %v1845 = vadd.f32 %v1842, %v1844
          %1846 = vst [vmem:[#allocation9] sm:$0xff] %v1845
        $region60: #{tpu_custom_call.1} parent=35 // pred_fallthru
          _
        // Predicated region
        $region61: #{tpu_custom_call.1} parent=35 // pred_check
          %p1847 = pneg %p129
        $region62: #{tpu_custom_call.1} parent=35 // pred_check_branch
          %1849 = sbr.rel (%p1847) target = $region64
        $region63: #{tpu_custom_call.1} parent=35 // pred_region
          %s1851 = ssub.s32 128, 128
          %1852 = vsyncadd [#allocation5], %s1851
          %s1854 = sshll.u32 [#allocation9], 4
          %s1855 = int_to_ptr.vmem [resolvable:$true] %s1854
          %1857 = dma.vmem_to_hbm [thread:$0]  %s1855, 128, %s4, [#allocation5]
        $region64: #{tpu_custom_call.1} parent=35 // pred_fallthru
          _
        // Predicated region
        $region65: #{tpu_custom_call.1} parent=35 // pred_check
          %p1858 = pneg %p129
        $region66: #{tpu_custom_call.1} parent=35 // pred_check_branch
          %1860 = sbr.rel (%p1858) target = $region68
        $region67: #{tpu_custom_call.1} parent=35 // pred_region
          %1861 = dma.done [#allocation5], 128
        $region68: #{tpu_custom_call.1} parent=35 // pred_fallthru
          _
      $region36: #{tpu_custom_call.1} parent=5 // pred_fallthru
        _
      %p1862 = scmp.le.s32.totalorder 2, %s17
      // Predicated region
      $region69: #{tpu_custom_call.1} parent=5 // pred_check
        %p1863 = pneg %p1862
      $region70: #{tpu_custom_call.1} parent=5 // pred_check_branch
        %1865 = sbr.rel (%p1863) target = $region72
      $region71: #{tpu_custom_call.1} parent=5 // pred_region
        %s1866 = ssub.s32 %s17, 2
      $region72: #{tpu_custom_call.1} parent=5 // pred_fallthru
        _
    $region6: #{tpu_custom_call.1} parent=1 // loop_footer
      %s21 = sadd.s32 1, %s17
    $region7: #{tpu_custom_call.1} parent=1 // loop_footer_branch
      %16 = sbr.rel target = $region3
    $region8: #{tpu_custom_call.1} parent=1 // loop_exit
      _
    %1867 = vsyncpa [#allocation4], 1
    %s1868 = scalar_lea.sflag [#allocation4], 1
    %1869 = vsyncpa %s1868, 1
    %1870 = vsyncpa [#allocation7], 1
    %s1871 = scalar_lea.sflag [#allocation7], 1
    %1872 = vsyncpa %s1871, 1
    %1873 = vsyncpa [#allocation5], 1
    %s1874 = scalar_lea.sflag [#allocation5], 1
    %1875 = vsyncpa %s1874, 1

</llo_original>
